<compile_context>
chip_gen: v7x
topology: tpu7x:2x2x1
jax: 0.10.0
libtpu: 0.0.40
codegen_flags: <defaults>
</compile_context>

<pallas_src>
import math

import jax
import jax.numpy as jnp
from jax import lax
from jax.experimental import pallas as pl
from jax.experimental.pallas import tpu as pltpu

EMB_DIM = 128          # emb_dim of the module
FREQ_CHANNELS = 256    # Timesteps(num_channels=256)
LN_EPS = 1e-5          # PyTorch LayerNorm default eps


def _round_up(x, m):
    return ((x + m - 1) // m) * m


# ---------------------------------------------------------------------------
# Kernel: LayerNorm (no affine) + per-part (1+scale)/shift modulation.
# ---------------------------------------------------------------------------
def adaln_kernel(emb_ref, x_ref, batch_ref, out_ref):
    # ---- LayerNorm in f32, two-pass (matches the reference exactly).
    x = x_ref[...].astype(jnp.float32)                         # (TN, D)
    d = x.shape[-1]
    inv_d = 1.0 / float(d)
    mean = jnp.sum(x, axis=-1, keepdims=True) * inv_d
    c = x - mean
    var = jnp.sum(c * c, axis=-1, keepdims=True) * inv_d
    xn = c * lax.rsqrt(var + LN_EPS)

    # ---- per-point (scale, shift) gather: one-hot x (P_pad, 2D) matmul in
    # bf16 (exact one-hot, ample precision for a modulation, ~3x fewer MXU
    # passes than f32). Rows >= P of the padded table are zero and never
    # selected by valid batch indices.
    idx = batch_ref[...]                                        # (TN, 1) int32
    p_pad = emb_ref.shape[0]
    part_ids = lax.broadcasted_iota(jnp.int32, (1, p_pad), 1)   # (1, P_pad)
    onehot = (idx == part_ids).astype(jnp.bfloat16)             # (TN, P_pad)
    ss = jnp.dot(onehot, emb_ref[...],
                 preferred_element_type=jnp.float32)            # (TN, 2D) f32
    scale = ss[:, :d]
    shift = ss[:, d:]

    out_ref[...] = (xn * (1.0 + scale) + shift).astype(out_ref.dtype)


# ---------------------------------------------------------------------------
# Timestep embedding MLP (tiny: P x ~100 KFLOP) — plain JAX in the wrapper.
# ---------------------------------------------------------------------------
def _timestep_mlp(timestep, params):
    half = FREQ_CHANNELS // 2
    k = jnp.arange(half, dtype=jnp.float32)
    # downscale_freq_shift = 0  ->  divide by half
    freqs = jnp.exp(-math.log(10000.0) * k / float(half))
    arg = timestep.astype(jnp.float32)[:, None] * freqs[None, :]
    # flip_sin_to_cos=True  ->  [cos, sin]
    sinus = jnp.concatenate([jnp.cos(arg), jnp.sin(arg)], axis=-1)   # (P, 256)
    h = jax.nn.silu(sinus @ params["w1"] + params["b1"])             # Linear1 + SiLU
    h = jax.nn.silu(h @ params["w2"] + params["b2"])                 # Linear2 + SiLU
    return h @ params["w3"] + params["b3"]                           # (P, 2D)


# ---------------------------------------------------------------------------
# Wrapper
# ---------------------------------------------------------------------------
def adaptive_layer_norm(x, timestep, batch, params, *, target_tile_bytes=2 << 20):
    n, d = x.shape
    p = timestep.shape[0]
    itemsize = x.dtype.itemsize

    # (P, 2D) scale/shift table, computed once; padded to a clean bf16 tile.
    emb = _timestep_mlp(timestep, params)                       # (P, 2D) f32
    p_pad = max(16, _round_up(p, 16))
    emb_bf16 = jnp.zeros((p_pad, 2 * d), jnp.bfloat16).at[:p].set(
        emb.astype(jnp.bfloat16))

    # Tile sizing: dtype-correct sublane multiple, ~2 MiB x-tiles, and >= 4
    # grid steps (2 per v7x TensorCore) when there is enough work to split.
    sub = max(8, 32 // itemsize)
    tile_n = max(sub, (target_tile_bytes // (d * itemsize)) // sub * sub)
    tile_n = min(tile_n, _round_up(n, sub))
    if n > 2048:
        tile_n = min(tile_n, _round_up(pl.cdiv(n, 4), sub))
    grid_n = pl.cdiv(n, tile_n)

    batch2 = batch.astype(jnp.int32).reshape(n, 1)

    # Explicit scoped-VMEM budget (double-buffered). The (tile_n, 1) int32
    # index column lane-pads to (tile_n, 128) in VMEM, so count it full-width.
    x_tile = tile_n * d * itemsize
    batch_tile = tile_n * 128 * 4
    emb_tile = p_pad * _round_up(2 * d, 128) * 2
    vmem_limit = int(min(max(2 * (2 * x_tile + batch_tile + emb_tile) + (4 << 20),
                             16 << 20), 100 << 20))

    cost = pl.CostEstimate(
        flops=2 * n * p_pad * 2 * d + 8 * n * d,
        transcendentals=n,
        bytes_accessed=2 * n * d * itemsize + n * 4 + p_pad * 2 * d * 2,
    )

    return pl.pallas_call(
        adaln_kernel,
        out_shape=jax.ShapeDtypeStruct((n, d), x.dtype),
        grid_spec=pl.GridSpec(
            grid=(grid_n,),
            in_specs=[
                pl.BlockSpec((p_pad, 2 * d), lambda i: (0, 0)),   # emb table
                pl.BlockSpec((tile_n, d), lambda i: (i, 0)),      # x
                pl.BlockSpec((tile_n, 1), lambda i: (i, 0)),      # batch idx
            ],
            out_specs=pl.BlockSpec((tile_n, d), lambda i: (i, 0)),
        ),
        compiler_params=pltpu.CompilerParams(
            dimension_semantics=("parallel",),
            vmem_limit_bytes=vmem_limit),
        cost_estimate=cost,
    )(emb_bf16, x, batch2)


# ---------------------------------------------------------------------------
# Pure-JAX reference (mirrors the PyTorch forward, all f32)
# ---------------------------------------------------------------------------
def reference(x, timestep, batch, params):
    emb = _timestep_mlp(timestep, params)
    scale, shift = jnp.split(emb, 2, axis=1)
    scale = scale[batch]
    shift = shift[batch]
    mean = x.mean(-1, keepdims=True)
    var = ((x - mean) ** 2).mean(-1, keepdims=True)
    xn = (x - mean) / jnp.sqrt(var + LN_EPS)
    return xn * (1.0 + scale) + shift


if __name__ == "__main__":
    key = jax.random.PRNGKey(0)
    keys = jax.random.split(key, 9)

    # N chosen so the wrapper produces a 4-step parallel grid with a ragged
    # final tile (exercises multi-step pipelining and the padded-tail path).
    N, D, P = 3000, EMB_DIM, 4          # n_points, emb_dim, n_valid_parts

    # Deterministic synthetic parameters (shapes match the module's __init__,
    # stored as (fan_in, fan_out) so everything computes y = x @ W + b).
    params = {
        "w1": jax.random.normal(keys[0], (FREQ_CHANNELS, D), jnp.float32) * 0.02,
        "b1": jax.random.normal(keys[1], (1, D), jnp.float32) * 0.02,
        "w2": jax.random.normal(keys[2], (D, D), jnp.float32) * 0.02,
        "b2": jax.random.normal(keys[3], (1, D), jnp.float32) * 0.02,
        "w3": jax.random.normal(keys[4], (D, 2 * D), jnp.float32) * 0.02,
        "b3": jax.random.normal(keys[5], (1, 2 * D), jnp.float32) * 0.02,
    }

    x = jax.random.normal(keys[6], (N, D), jnp.float32)
    timestep = jax.random.uniform(keys[7], (P,), jnp.float32, 0.0, 1000.0)
    batch = jax.random.randint(keys[8], (N,), 0, P, jnp.int32)

    out = adaptive_layer_norm(x, timestep, batch, params)
    out = jax.block_until_ready(out)

    ref = reference(x, timestep, batch, params)
    assert out.shape == (N, D)
    err = float(jnp.max(jnp.abs(out - ref)))
    assert jnp.allclose(out, ref, atol=2e-2, rtol=2e-2), f"max abs err = {err}"
    print("KERNEL_OK")
</pallas_src>

<mosaic_0001>
module attributes {stable_mosaic.version = 11 : i64} {
  func.func @adaln_kernel(%arg0: i32, %arg1: memref<16x256xbf16, #tpu.memory_space<vmem>>, %arg2: memref<752x128xf32, #tpu.memory_space<vmem>>, %arg3: memref<752x1xi32, #tpu.memory_space<vmem>>, %arg4: memref<752x128xf32, #tpu.memory_space<vmem>>) attributes {dimension_semantics = [#tpu.dimension_semantics<parallel>], iteration_bounds = array<i64: 4>, scalar_prefetch = 0 : i64, scratch_operands = 0 : i64, tpu.core_type = #tpu.core_type<tc>, window_params = [{pipeline_mode = #tpu.pipeline_mode<synchronous>, transform_indices = @transform_0, window_bounds = array<i64: 16, 256>}, {transform_indices = @transform_1, window_bounds = array<i64: 752, 128>}, {transform_indices = @transform_2, window_bounds = array<i64: 752, 1>}, {transform_indices = @transform_3, window_bounds = array<i64: 752, 128>}]} {
    %c0 = arith.constant 0 : index
    %c0_0 = arith.constant 0 : index
    %0 = vector.load %arg2[%c0, %c0_0] : memref<752x128xf32, #tpu.memory_space<vmem>>, vector<752x128xf32>
    %cst = arith.constant dense<0.000000e+00> : vector<752xf32>
    %1 = vector.multi_reduction <add>, %0, %cst [1] : vector<752x128xf32> to vector<752xf32>
    %2 = vector.shape_cast %1 : vector<752xf32> to vector<752x1xf32>
    %cst_1 = arith.constant 7.812500e-03 : f32
    %3 = vector.broadcast %cst_1 : f32 to vector<752x1xf32>
    %4 = arith.mulf %2, %3 : vector<752x1xf32>
    %5 = vector.broadcast %4 : vector<752x1xf32> to vector<752x128xf32>
    %6 = arith.subf %0, %5 : vector<752x128xf32>
    %7 = arith.mulf %6, %6 : vector<752x128xf32>
    %cst_2 = arith.constant dense<0.000000e+00> : vector<752xf32>
    %8 = vector.multi_reduction <add>, %7, %cst_2 [1] : vector<752x128xf32> to vector<752xf32>
    %9 = vector.shape_cast %8 : vector<752xf32> to vector<752x1xf32>
    %cst_3 = arith.constant 7.812500e-03 : f32
    %10 = vector.broadcast %cst_3 : f32 to vector<752x1xf32>
    %11 = arith.mulf %9, %10 : vector<752x1xf32>
    %cst_4 = arith.constant 9.99999974E-6 : f32
    %12 = vector.broadcast %cst_4 : f32 to vector<752x1xf32>
    %13 = arith.addf %11, %12 : vector<752x1xf32>
    %14 = math.rsqrt %13 : vector<752x1xf32>
    %15 = vector.broadcast %14 : vector<752x1xf32> to vector<752x128xf32>
    %16 = arith.mulf %6, %15 : vector<752x128xf32>
    %c0_5 = arith.constant 0 : index
    %c0_6 = arith.constant 0 : index
    %17 = vector.load %arg3[%c0_5, %c0_6] : memref<752x1xi32, #tpu.memory_space<vmem>>, vector<752x1xi32>
    %18 = tpu.iota {dimensions = array<i32: 1>} : vector<1x16xi32>
    %19 = vector.broadcast %17 : vector<752x1xi32> to vector<752x16xi32>
    %20 = vector.broadcast %18 : vector<1x16xi32> to vector<752x16xi32>
    %21 = arith.cmpi eq, %19, %20 : vector<752x16xi32>
    %22 = arith.extui %21 : vector<752x16xi1> to vector<752x16xi32>
    %23 = arith.sitofp %22 : vector<752x16xi32> to vector<752x16xf32>
    %24 = arith.truncf %23 : vector<752x16xf32> to vector<752x16xbf16>
    %c0_7 = arith.constant 0 : index
    %c0_8 = arith.constant 0 : index
    %25 = vector.load %arg1[%c0_7, %c0_8] : memref<16x256xbf16, #tpu.memory_space<vmem>>, vector<16x256xbf16>
    %cst_9 = arith.constant dense<0.000000e+00> : vector<752x256xf32>
    %26 = tpu.matmul %24, %25, %cst_9 {dimension_numbers = #tpu.dot_dimension_numbers<[1], [0], [0], [1], [0, 0, 1, 1], [], []>} : vector<752x16xbf16>, vector<16x256xbf16>, vector<752x256xf32> -> vector<752x256xf32>
    %27 = vector.extract_strided_slice %26 {offsets = [0, 0], sizes = [752, 128], strides = [1, 1]} : vector<752x256xf32> to vector<752x128xf32>
    %28 = vector.extract_strided_slice %26 {offsets = [0, 128], sizes = [752, 128], strides = [1, 1]} : vector<752x256xf32> to vector<752x128xf32>
    %cst_10 = arith.constant 1.000000e+00 : f32
    %29 = vector.broadcast %cst_10 : f32 to vector<752x128xf32>
    %30 = arith.addf %29, %27 : vector<752x128xf32>
    %31 = arith.mulf %16, %30 : vector<752x128xf32>
    %32 = arith.addf %31, %28 : vector<752x128xf32>
    %c0_11 = arith.constant 0 : index
    %c0_12 = arith.constant 0 : index
    %33 = vector.load %arg4[%c0_11, %c0_12] : memref<752x128xf32, #tpu.memory_space<vmem>>, vector<752x128xf32>
    tpu.vector_store %arg4[%c0_11, %c0_12], %32 {strides = array<i32>} : memref<752x128xf32, #tpu.memory_space<vmem>>, vector<752x128xf32>,
    return
  }
  func.func @transform_0(%arg0: i32) -> (i32, i32) {
    %c0_i32 = arith.constant 0 : i32
    %c0_i32_0 = arith.constant 0 : i32
    %c0_i32_1 = arith.constant 0 : i32
    return %c0_i32, %c0_i32_0 : i32, i32
  }
  func.func @transform_1(%arg0: i32) -> (i32, i32) {
    %c0_i32 = arith.constant 0 : i32
    %c0_i32_0 = arith.constant 0 : i32
    return %arg0, %c0_i32 : i32, i32
  }
  func.func @transform_2(%arg0: i32) -> (i32, i32) {
    %c0_i32 = arith.constant 0 : i32
    %c0_i32_0 = arith.constant 0 : i32
    return %arg0, %c0_i32 : i32, i32
  }
  func.func @transform_3(%arg0: i32) -> (i32, i32) {
    %c0_i32 = arith.constant 0 : i32
    %c0_i32_0 = arith.constant 0 : i32
    return %arg0, %c0_i32 : i32, i32
  }
}

</mosaic_0001>

<llo_original>
// kernel: tpu_custom_call.1
$region0: #{tpu_custom_call.1}
  #allocation0 [shape = 'u32[]', space=smem, size = 0x4, offset = 0x4, fixed_abs, tag = 'smem constant byte address 0x4 - core index']
  #allocation1 [shape = 'u32[144,128]{1,0:T(1,128)}', space=vmem, size = 0x12000, scoped, tag = 'internal scratch']
  %s0 = inlined_call_operand.vmem [shape: bf16[16,256], index: 0, kind: input, shape index: {}]
  %s1 = inlined_call_operand.vmem [shape: f32[3000,128], index: 1, kind: input, shape index: {}]
  %s2 = inlined_call_operand.vmem [shape: s32[3000,1], index: 2, kind: input, shape index: {}]
  %s3 = inlined_call_operand.hbm [shape: f32[3000,128], index: 3, kind: output, shape index: {}]
  %s4 = sld [smem:[#allocation0]]
  $region45: #{tpu_custom_call.1} parent=0
    _
  %s6 = ssub.s32 1, %s4
  %s7 = scalar_select 0, %s6, %s4
  $region1: #{tpu_custom_call.1} parent=0
    #allocation2 [shape = 'u8[770048]{0}', space=vmem, size = 0xbc000, scoped, tag = 'output window, operand 0']
    #allocation3 [shape = 's32[2]{0}', space=sflag, size = 0x8, scoped, tag = 'scoped memory for tpu_custom_call.1']
    %8 = vsyncpa [#allocation3], 0
    %s9 = scalar_lea.sflag [#allocation3], 1
    %10 = vsyncpa %s9, 0
    loop: start=0, step=1, limit=6
    $region2: #{tpu_custom_call.1} parent=1 // loop_pre_header
      _
    $region3: #{tpu_custom_call.1} parent=1 // loop_header
      %s12 = sphi 0, %s16
      %p13 = scmp.ge.s32.totalorder %s12, 6
      %s20 = sphi 0, %s20
      %s22 = sphi 0, %s20
      %s23 = sphi 0, %s22
      %s37 = sphi 0, %s23
      %s43 = sphi 0, %s45
      %s46 = sphi 0, %s43
      %s47 = sphi 0, %s46
      %s63 = sphi 0, %s47
      %s69 = sphi 0, %s71
      %s72 = sphi 0, %s69
      %s73 = sphi 0, %s72
      %s89 = sphi 0, %s73
      %s95 = sphi 0, %s97
      %s98 = sphi 0, %s95
      %s99 = sphi 0, %s98
      %s115 = sphi 0, %s99
    $region4: #{tpu_custom_call.1} parent=1 // loop_header_branch
      %15 = sbr.rel (%p13) target = $region8
    $region5: #{tpu_custom_call.1} parent=1 // loop_body
      %s17 = ssub.s32 %s12, 1
      %s18 = ssub.s32 %s12, 2
      %s19 = sadd.s32 %s12, 1
      %s21 = sadd.s32 %s20, 1
      %p24 = scmp.eq.s32.totalorder %s12, 3
      %p25 = scmp.ne.s32.totalorder %s20, %s22
      %p26 = scmp.eq.s32.totalorder %s12, 0
      %p27 = por %p25, %p26
      %p28 = scmp.ne.s32.totalorder %s20, %s22
      %p29 = scmp.eq.s32.totalorder %s17, 3
      %p30 = por %p28, %p29
      %p31 = scmp.ne.s32.totalorder %s22, %s23
      %p32 = scmp.eq.s32.totalorder %s17, 0
      %p33 = por %p31, %p32
      %p34 = scmp.ne.s32.totalorder %s22, %s23
      %p35 = scmp.eq.s32.totalorder %s18, 3
      %p36 = por %p34, %p35
      %p38 = scmp.ne.s32.totalorder %s23, %s37
      %p39 = scmp.eq.s32.totalorder %s18, 0
      %p40 = por %p38, %p39
      %s41 = ssub.s32 %s12, %s19
      %p42 = scmp.eq.s32.totalorder %s41, 0
      %s44 = sadd.s32 %s43, 1
      %s45 = scalar_select %p42, %s43, %s44
      %p48 = pneg %p42
      %p49 = scmp.eq.s32.totalorder %s12, 3
      %p50 = por %p48, %p49
      %p51 = scmp.ne.s32.totalorder %s43, %s46
      %p52 = scmp.eq.s32.totalorder %s12, 0
      %p53 = por %p51, %p52
      %p54 = scmp.ne.s32.totalorder %s43, %s46
      %p55 = scmp.eq.s32.totalorder %s17, 3
      %p56 = por %p54, %p55
      %p57 = scmp.ne.s32.totalorder %s46, %s47
      %p58 = scmp.eq.s32.totalorder %s17, 0
      %p59 = por %p57, %p58
      %p60 = scmp.ne.s32.totalorder %s46, %s47
      %p61 = scmp.eq.s32.totalorder %s18, 3
      %p62 = por %p60, %p61
      %p64 = scmp.ne.s32.totalorder %s47, %s63
      %p65 = scmp.eq.s32.totalorder %s18, 0
      %p66 = por %p64, %p65
      %s67 = ssub.s32 %s12, %s19
      %p68 = scmp.eq.s32.totalorder %s67, 0
      %s70 = sadd.s32 %s69, 1
      %s71 = scalar_select %p68, %s69, %s70
      %p74 = pneg %p68
      %p75 = scmp.eq.s32.totalorder %s12, 3
      %p76 = por %p74, %p75
      %p77 = scmp.ne.s32.totalorder %s69, %s72
      %p78 = scmp.eq.s32.totalorder %s12, 0
      %p79 = por %p77, %p78
      %p80 = scmp.ne.s32.totalorder %s69, %s72
      %p81 = scmp.eq.s32.totalorder %s17, 3
      %p82 = por %p80, %p81
      %p83 = scmp.ne.s32.totalorder %s72, %s73
      %p84 = scmp.eq.s32.totalorder %s17, 0
      %p85 = por %p83, %p84
      %p86 = scmp.ne.s32.totalorder %s72, %s73
      %p87 = scmp.eq.s32.totalorder %s18, 3
      %p88 = por %p86, %p87
      %p90 = scmp.ne.s32.totalorder %s73, %s89
      %p91 = scmp.eq.s32.totalorder %s18, 0
      %p92 = por %p90, %p91
      %s93 = ssub.s32 %s12, %s19
      %p94 = scmp.eq.s32.totalorder %s93, 0
      %s96 = sadd.s32 %s95, 1
      %s97 = scalar_select %p94, %s95, %s96
      %p100 = pneg %p94
      %p101 = scmp.eq.s32.totalorder %s12, 3
      %p102 = por %p100, %p101
      %p103 = scmp.ne.s32.totalorder %s95, %s98
      %p104 = scmp.eq.s32.totalorder %s12, 0
      %p105 = por %p103, %p104
      %p106 = scmp.ne.s32.totalorder %s95, %s98
      %p107 = scmp.eq.s32.totalorder %s17, 3
      %p108 = por %p106, %p107
      %p109 = scmp.ne.s32.totalorder %s98, %s99
      %p110 = scmp.eq.s32.totalorder %s17, 0
      %p111 = por %p109, %p110
      %p112 = scmp.ne.s32.totalorder %s98, %s99
      %p113 = scmp.eq.s32.totalorder %s18, 3
      %p114 = por %p112, %p113
      %p116 = scmp.ne.s32.totalorder %s99, %s115
      %p117 = scmp.eq.s32.totalorder %s18, 0
      %p118 = por %p116, %p117
      %p119 = scmp.le.s32.totalorder 1, %s12
      %p120 = scmp.lt.s32.totalorder %s12, 5
      %p121 = pnand %p119, %p120
      %p122 = pneg %p121
      // Predicated region
      $region9: #{tpu_custom_call.1} parent=5 // pred_check
        _
      $region10: #{tpu_custom_call.1} parent=5 // pred_check_branch
        %124 = sbr.rel (%p121) target = $region12
      $region11: #{tpu_custom_call.1} parent=5 // pred_region
        %s125 = ssub.s32 %s12, 1
        // Predicated region
        $region13: #{tpu_custom_call.1} parent=11 // pred_check
          %p126 = pneg %p33
        $region14: #{tpu_custom_call.1} parent=11 // pred_check_branch
          %128 = sbr.rel (%p126) target = $region16
        $region15: #{tpu_custom_call.1} parent=11 // pred_region
          _
        $region16: #{tpu_custom_call.1} parent=11 // pred_fallthru
          _
      $region12: #{tpu_custom_call.1} parent=5 // pred_fallthru
        _
      %p129 = scmp.lt.s32.totalorder %s12, 4
      // Predicated region
      $region17: #{tpu_custom_call.1} parent=5 // pred_check
        %p130 = pneg %p129
      $region18: #{tpu_custom_call.1} parent=5 // pred_check_branch
        %132 = sbr.rel (%p130) target = $region20
      $region19: #{tpu_custom_call.1} parent=5 // pred_region
        // Predicated region
        $region21: #{tpu_custom_call.1} parent=19 // pred_check
          %p133 = pneg %p53
        $region22: #{tpu_custom_call.1} parent=19 // pred_check_branch
          %135 = sbr.rel (%p133) target = $region24
        $region23: #{tpu_custom_call.1} parent=19 // pred_region
          %s136 = smul.u32 94, %s12
          %s137 = ssub.s32 375, %s136
          %p138 = scmp.lt.s32.totalorder %s137, 94
          %s139 = scalar_select %p138, %s137, 94
          %s140 = smul.u32 128, %s139
          %p141 = scmp.lt.s32.totalorder %s136, 374
          %s142 = scalar_select %p141, %s136, 374
          %s143 = smul.addr %s142, 8
          %s144 = scalar_lea.vmem %s1, %s143
          %s145 = smul.u32 94, %s12
          %s146 = ssub.s32 375, %s145
          %p147 = scmp.lt.s32.totalorder %s146, 94
          %s148 = scalar_select %p147, %s146, 94
          %s149 = smul.u32 128, %s148
        $region24: #{tpu_custom_call.1} parent=19 // pred_fallthru
          _
        // Predicated region
        $region25: #{tpu_custom_call.1} parent=19 // pred_check
          %p150 = pneg %p79
        $region26: #{tpu_custom_call.1} parent=19 // pred_check_branch
          %152 = sbr.rel (%p150) target = $region28
        $region27: #{tpu_custom_call.1} parent=19 // pred_region
          %s153 = smul.u32 94, %s12
          %s154 = ssub.s32 375, %s153
          %p155 = scmp.lt.s32.totalorder %s154, 94
          %s156 = scalar_select %p155, %s154, 94
          %s157 = smul.u32 128, %s156
          %p158 = scmp.lt.s32.totalorder %s153, 374
          %s159 = scalar_select %p158, %s153, 374
          %s160 = smul.addr %s159, 8
          %s161 = scalar_lea.vmem %s2, %s160
          %s162 = smul.u32 94, %s12
          %s163 = ssub.s32 375, %s162
          %p164 = scmp.lt.s32.totalorder %s163, 94
          %s165 = scalar_select %p164, %s163, 94
          %s166 = smul.u32 128, %s165
        $region28: #{tpu_custom_call.1} parent=19 // pred_fallthru
          _
      $region20: #{tpu_custom_call.1} parent=5 // pred_fallthru
        _
      %p167 = scmp.le.s32.totalorder 1, %s12
      %p168 = scmp.lt.s32.totalorder %s12, 5
      %p169 = pnand %p167, %p168
      %p170 = pneg %p169
      // Predicated region
      $region29: #{tpu_custom_call.1} parent=5 // pred_check
        _
      $region30: #{tpu_custom_call.1} parent=5 // pred_check_branch
        %172 = sbr.rel (%p169) target = $region32
      $region31: #{tpu_custom_call.1} parent=5 // pred_region
        %s173 = ssub.s32 %s12, 1
        %p174 = pneg %p33
        %p175 = pneg %p30
        %s176 = smul.u32 94, %s17
        %s177 = ssub.s32 375, %s176
        %p178 = scmp.lt.s32.totalorder %s177, 94
        %s179 = scalar_select %p178, %s177, 94
        %s180 = smul.u32 128, %s179
        %p181 = scmp.lt.s32.totalorder %s176, 374
        %s182 = scalar_select %p181, %s176, 374
        %s183 = smul.addr %s182, 8
        %s184 = scalar_lea.vmem %s1, %s183
        %p185 = pneg %p59
        %p186 = pneg %p56
        %s187 = smul.u32 94, %s17
        %s188 = ssub.s32 375, %s187
        %p189 = scmp.lt.s32.totalorder %s188, 94
        %s190 = scalar_select %p189, %s188, 94
        %s191 = smul.u32 128, %s190
        %p192 = scmp.lt.s32.totalorder %s187, 374
        %s193 = scalar_select %p192, %s187, 374
        %s194 = smul.addr %s193, 8
        %s195 = scalar_lea.vmem %s2, %s194
        %p196 = pneg %p85
        %p197 = pneg %p82
        %p198 = pneg %p111
        %p199 = pneg %p108
        %s200 = sand.u32 %s98, 1
        %s201 = scalar_lea.sflag [#allocation3], %s200
        %s202 = sand.u32 %s98, 1
        %s203 = smul.addr %s202, 752
        %s204 = scalar_lea.vmem [#allocation2], %s203
        %s205 = smul.u32 94, %s17
        %s206 = ssub.s32 375, %s205
        %p207 = scmp.lt.s32.totalorder %s206, 94
        %s208 = scalar_select %p207, %s206, 94
        %s209 = smul.u32 128, %s208
        %p210 = scmp.lt.s32.totalorder %s205, 374
        %s211 = scalar_select %p210, %s205, 374
        %s212 = smul.addr %s211, 8
        %s213 = scalar_lea.vmem %s1, %s212
        %s214 = smul.u32 94, %s17
        %s215 = ssub.s32 375, %s214
        %p216 = scmp.lt.s32.totalorder %s215, 94
        %s217 = scalar_select %p216, %s215, 94
        %s218 = smul.u32 128, %s217
        %s219 = smul.u32 94, %s17
        %s220 = ssub.s32 375, %s219
        %p221 = scmp.lt.s32.totalorder %s220, 94
        %s222 = scalar_select %p221, %s220, 94
        %s223 = smul.u32 128, %s222
        %p224 = scmp.lt.s32.totalorder %s219, 374
        %s225 = scalar_select %p224, %s219, 374
        %s226 = smul.addr %s225, 8
        %s227 = scalar_lea.vmem %s2, %s226
        %s228 = smul.u32 94, %s17
        %s229 = ssub.s32 375, %s228
        %p230 = scmp.lt.s32.totalorder %s229, 94
        %s231 = scalar_select %p230, %s229, 94
        %s232 = smul.u32 128, %s231
        %s233 = smul.u32 94, %s17
        %s234 = ssub.s32 375, %s233
        %p235 = scmp.lt.s32.totalorder %s234, 94
        %s236 = scalar_select %p235, %s234, 94
        %s237 = smul.u32 128, %s236
        %v239 = vld [vmem:[%s213] sm:$0xff]
        %v240 = vld [vmem:[%s213 + $0x8] sm:$0xff]
        %v241 = vld [vmem:[%s213 + $0x10] sm:$0xff]
        %v242 = vld [vmem:[%s213 + $0x18] sm:$0xff]
        %v243 = vld [vmem:[%s213 + $0x20] sm:$0xff]
        %v244 = vld [vmem:[%s213 + $0x28] sm:$0xff]
        %v245 = vld [vmem:[%s213 + $0x30] sm:$0xff]
        %v246 = vld [vmem:[%s213 + $0x38] sm:$0xff]
        %v247 = vld [vmem:[%s213 + $0x40] sm:$0xff]
        %v248 = vld [vmem:[%s213 + $0x48] sm:$0xff]
        %v249 = vld [vmem:[%s213 + $0x50] sm:$0xff]
        %v250 = vld [vmem:[%s213 + $0x58] sm:$0xff]
        %v251 = vld [vmem:[%s213 + $0x60] sm:$0xff]
        %v252 = vld [vmem:[%s213 + $0x68] sm:$0xff]
        %v253 = vld [vmem:[%s213 + $0x70] sm:$0xff]
        %v254 = vld [vmem:[%s213 + $0x78] sm:$0xff]
        %v255 = vld [vmem:[%s213 + $0x80] sm:$0xff]
        %v256 = vld [vmem:[%s213 + $0x88] sm:$0xff]
        %v257 = vld [vmem:[%s213 + $0x90] sm:$0xff]
        %v258 = vld [vmem:[%s213 + $0x98] sm:$0xff]
        %v259 = vld [vmem:[%s213 + $0xa0] sm:$0xff]
        %v260 = vld [vmem:[%s213 + $0xa8] sm:$0xff]
        %v261 = vld [vmem:[%s213 + $0xb0] sm:$0xff]
        %v262 = vld [vmem:[%s213 + $0xb8] sm:$0xff]
        %v263 = vld [vmem:[%s213 + $0xc0] sm:$0xff]
        %v264 = vld [vmem:[%s213 + $0xc8] sm:$0xff]
        %v265 = vld [vmem:[%s213 + $0xd0] sm:$0xff]
        %v266 = vld [vmem:[%s213 + $0xd8] sm:$0xff]
        %v267 = vld [vmem:[%s213 + $0xe0] sm:$0xff]
        %v268 = vld [vmem:[%s213 + $0xe8] sm:$0xff]
        %v269 = vld [vmem:[%s213 + $0xf0] sm:$0xff]
        %v270 = vld [vmem:[%s213 + $0xf8] sm:$0xff]
        %v271 = vld [vmem:[%s213 + $0x100] sm:$0xff]
        %v272 = vld [vmem:[%s213 + $0x108] sm:$0xff]
        %v273 = vld [vmem:[%s213 + $0x110] sm:$0xff]
        %v274 = vld [vmem:[%s213 + $0x118] sm:$0xff]
        %v275 = vld [vmem:[%s213 + $0x120] sm:$0xff]
        %v276 = vld [vmem:[%s213 + $0x128] sm:$0xff]
        %v277 = vld [vmem:[%s213 + $0x130] sm:$0xff]
        %v278 = vld [vmem:[%s213 + $0x138] sm:$0xff]
        %v279 = vld [vmem:[%s213 + $0x140] sm:$0xff]
        %v280 = vld [vmem:[%s213 + $0x148] sm:$0xff]
        %v281 = vld [vmem:[%s213 + $0x150] sm:$0xff]
        %v282 = vld [vmem:[%s213 + $0x158] sm:$0xff]
        %v283 = vld [vmem:[%s213 + $0x160] sm:$0xff]
        %v284 = vld [vmem:[%s213 + $0x168] sm:$0xff]
        %v285 = vld [vmem:[%s213 + $0x170] sm:$0xff]
        %v286 = vld [vmem:[%s213 + $0x178] sm:$0xff]
        %v287 = vld [vmem:[%s213 + $0x180] sm:$0xff]
        %v288 = vld [vmem:[%s213 + $0x188] sm:$0xff]
        %v289 = vld [vmem:[%s213 + $0x190] sm:$0xff]
        %v290 = vld [vmem:[%s213 + $0x198] sm:$0xff]
        %v291 = vld [vmem:[%s213 + $0x1a0] sm:$0xff]
        %v292 = vld [vmem:[%s213 + $0x1a8] sm:$0xff]
        %v293 = vld [vmem:[%s213 + $0x1b0] sm:$0xff]
        %v294 = vld [vmem:[%s213 + $0x1b8] sm:$0xff]
        %v295 = vld [vmem:[%s213 + $0x1c0] sm:$0xff]
        %v296 = vld [vmem:[%s213 + $0x1c8] sm:$0xff]
        %v297 = vld [vmem:[%s213 + $0x1d0] sm:$0xff]
        %v298 = vld [vmem:[%s213 + $0x1d8] sm:$0xff]
        %v299 = vld [vmem:[%s213 + $0x1e0] sm:$0xff]
        %v300 = vld [vmem:[%s213 + $0x1e8] sm:$0xff]
        %v301 = vld [vmem:[%s213 + $0x1f0] sm:$0xff]
        %v302 = vld [vmem:[%s213 + $0x1f8] sm:$0xff]
        %v303 = vld [vmem:[%s213 + $0x200] sm:$0xff]
        %v304 = vld [vmem:[%s213 + $0x208] sm:$0xff]
        %v305 = vld [vmem:[%s213 + $0x210] sm:$0xff]
        %v306 = vld [vmem:[%s213 + $0x218] sm:$0xff]
        %v307 = vld [vmem:[%s213 + $0x220] sm:$0xff]
        %v308 = vld [vmem:[%s213 + $0x228] sm:$0xff]
        %v309 = vld [vmem:[%s213 + $0x230] sm:$0xff]
        %v310 = vld [vmem:[%s213 + $0x238] sm:$0xff]
        %v311 = vld [vmem:[%s213 + $0x240] sm:$0xff]
        %v312 = vld [vmem:[%s213 + $0x248] sm:$0xff]
        %v313 = vld [vmem:[%s213 + $0x250] sm:$0xff]
        %v314 = vld [vmem:[%s213 + $0x258] sm:$0xff]
        %v315 = vld [vmem:[%s213 + $0x260] sm:$0xff]
        %v316 = vld [vmem:[%s213 + $0x268] sm:$0xff]
        %v317 = vld [vmem:[%s213 + $0x270] sm:$0xff]
        %v318 = vld [vmem:[%s213 + $0x278] sm:$0xff]
        %v319 = vld [vmem:[%s213 + $0x280] sm:$0xff]
        %v320 = vld [vmem:[%s213 + $0x288] sm:$0xff]
        %v321 = vld [vmem:[%s213 + $0x290] sm:$0xff]
        %v322 = vld [vmem:[%s213 + $0x298] sm:$0xff]
        %v323 = vld [vmem:[%s213 + $0x2a0] sm:$0xff]
        %v324 = vld [vmem:[%s213 + $0x2a8] sm:$0xff]
        %v325 = vld [vmem:[%s213 + $0x2b0] sm:$0xff]
        %v326 = vld [vmem:[%s213 + $0x2b8] sm:$0xff]
        %v327 = vld [vmem:[%s213 + $0x2c0] sm:$0xff]
        %v328 = vld [vmem:[%s213 + $0x2c8] sm:$0xff]
        %v329 = vld [vmem:[%s213 + $0x2d0] sm:$0xff]
        %v330 = vld [vmem:[%s213 + $0x2d8] sm:$0xff]
        %v331 = vld [vmem:[%s213 + $0x2e0] sm:$0xff]
        %v332 = vld [vmem:[%s213 + $0x2e8] sm:$0xff]
        %333 = vadd.xlane.f32.xlu0 %v239
        %v334 = vpop.xlane.xlu0 %333
        %335 = vadd.xlane.f32.xlu0 %v240
        %v336 = vpop.xlane.xlu0 %335
        %337 = vadd.xlane.f32.xlu0 %v241
        %v338 = vpop.xlane.xlu0 %337
        %339 = vadd.xlane.f32.xlu0 %v242
        %v340 = vpop.xlane.xlu0 %339
        %341 = vadd.xlane.f32.xlu0 %v243
        %v342 = vpop.xlane.xlu0 %341
        %343 = vadd.xlane.f32.xlu0 %v244
        %v344 = vpop.xlane.xlu0 %343
        %345 = vadd.xlane.f32.xlu0 %v245
        %v346 = vpop.xlane.xlu0 %345
        %347 = vadd.xlane.f32.xlu0 %v246
        %v348 = vpop.xlane.xlu0 %347
        %349 = vadd.xlane.f32.xlu0 %v247
        %v350 = vpop.xlane.xlu0 %349
        %351 = vadd.xlane.f32.xlu0 %v248
        %v352 = vpop.xlane.xlu0 %351
        %353 = vadd.xlane.f32.xlu0 %v249
        %v354 = vpop.xlane.xlu0 %353
        %355 = vadd.xlane.f32.xlu0 %v250
        %v356 = vpop.xlane.xlu0 %355
        %357 = vadd.xlane.f32.xlu0 %v251
        %v358 = vpop.xlane.xlu0 %357
        %359 = vadd.xlane.f32.xlu0 %v252
        %v360 = vpop.xlane.xlu0 %359
        %361 = vadd.xlane.f32.xlu0 %v253
        %v362 = vpop.xlane.xlu0 %361
        %363 = vadd.xlane.f32.xlu0 %v254
        %v364 = vpop.xlane.xlu0 %363
        %365 = vadd.xlane.f32.xlu0 %v255
        %v366 = vpop.xlane.xlu0 %365
        %367 = vadd.xlane.f32.xlu0 %v256
        %v368 = vpop.xlane.xlu0 %367
        %369 = vadd.xlane.f32.xlu0 %v257
        %v370 = vpop.xlane.xlu0 %369
        %371 = vadd.xlane.f32.xlu0 %v258
        %v372 = vpop.xlane.xlu0 %371
        %373 = vadd.xlane.f32.xlu0 %v259
        %v374 = vpop.xlane.xlu0 %373
        %375 = vadd.xlane.f32.xlu0 %v260
        %v376 = vpop.xlane.xlu0 %375
        %377 = vadd.xlane.f32.xlu0 %v261
        %v378 = vpop.xlane.xlu0 %377
        %379 = vadd.xlane.f32.xlu0 %v262
        %v380 = vpop.xlane.xlu0 %379
        %381 = vadd.xlane.f32.xlu0 %v263
        %v382 = vpop.xlane.xlu0 %381
        %383 = vadd.xlane.f32.xlu0 %v264
        %v384 = vpop.xlane.xlu0 %383
        %385 = vadd.xlane.f32.xlu0 %v265
        %v386 = vpop.xlane.xlu0 %385
        %387 = vadd.xlane.f32.xlu0 %v266
        %v388 = vpop.xlane.xlu0 %387
        %389 = vadd.xlane.f32.xlu0 %v267
        %v390 = vpop.xlane.xlu0 %389
        %391 = vadd.xlane.f32.xlu0 %v268
        %v392 = vpop.xlane.xlu0 %391
        %393 = vadd.xlane.f32.xlu0 %v269
        %v394 = vpop.xlane.xlu0 %393
        %395 = vadd.xlane.f32.xlu0 %v270
        %v396 = vpop.xlane.xlu0 %395
        %397 = vadd.xlane.f32.xlu0 %v271
        %v398 = vpop.xlane.xlu0 %397
        %399 = vadd.xlane.f32.xlu0 %v272
        %v400 = vpop.xlane.xlu0 %399
        %401 = vadd.xlane.f32.xlu0 %v273
        %v402 = vpop.xlane.xlu0 %401
        %403 = vadd.xlane.f32.xlu0 %v274
        %v404 = vpop.xlane.xlu0 %403
        %405 = vadd.xlane.f32.xlu0 %v275
        %v406 = vpop.xlane.xlu0 %405
        %407 = vadd.xlane.f32.xlu0 %v276
        %v408 = vpop.xlane.xlu0 %407
        %409 = vadd.xlane.f32.xlu0 %v277
        %v410 = vpop.xlane.xlu0 %409
        %411 = vadd.xlane.f32.xlu0 %v278
        %v412 = vpop.xlane.xlu0 %411
        %413 = vadd.xlane.f32.xlu0 %v279
        %v414 = vpop.xlane.xlu0 %413
        %415 = vadd.xlane.f32.xlu0 %v280
        %v416 = vpop.xlane.xlu0 %415
        %417 = vadd.xlane.f32.xlu0 %v281
        %v418 = vpop.xlane.xlu0 %417
        %419 = vadd.xlane.f32.xlu0 %v282
        %v420 = vpop.xlane.xlu0 %419
        %421 = vadd.xlane.f32.xlu0 %v283
        %v422 = vpop.xlane.xlu0 %421
        %423 = vadd.xlane.f32.xlu0 %v284
        %v424 = vpop.xlane.xlu0 %423
        %425 = vadd.xlane.f32.xlu0 %v285
        %v426 = vpop.xlane.xlu0 %425
        %427 = vadd.xlane.f32.xlu0 %v286
        %v428 = vpop.xlane.xlu0 %427
        %429 = vadd.xlane.f32.xlu0 %v287
        %v430 = vpop.xlane.xlu0 %429
        %431 = vadd.xlane.f32.xlu0 %v288
        %v432 = vpop.xlane.xlu0 %431
        %433 = vadd.xlane.f32.xlu0 %v289
        %v434 = vpop.xlane.xlu0 %433
        %435 = vadd.xlane.f32.xlu0 %v290
        %v436 = vpop.xlane.xlu0 %435
        %437 = vadd.xlane.f32.xlu0 %v291
        %v438 = vpop.xlane.xlu0 %437
        %439 = vadd.xlane.f32.xlu0 %v292
        %v440 = vpop.xlane.xlu0 %439
        %441 = vadd.xlane.f32.xlu0 %v293
        %v442 = vpop.xlane.xlu0 %441
        %443 = vadd.xlane.f32.xlu0 %v294
        %v444 = vpop.xlane.xlu0 %443
        %445 = vadd.xlane.f32.xlu0 %v295
        %v446 = vpop.xlane.xlu0 %445
        %447 = vadd.xlane.f32.xlu0 %v296
        %v448 = vpop.xlane.xlu0 %447
        %449 = vadd.xlane.f32.xlu0 %v297
        %v450 = vpop.xlane.xlu0 %449
        %451 = vadd.xlane.f32.xlu0 %v298
        %v452 = vpop.xlane.xlu0 %451
        %453 = vadd.xlane.f32.xlu0 %v299
        %v454 = vpop.xlane.xlu0 %453
        %455 = vadd.xlane.f32.xlu0 %v300
        %v456 = vpop.xlane.xlu0 %455
        %457 = vadd.xlane.f32.xlu0 %v301
        %v458 = vpop.xlane.xlu0 %457
        %459 = vadd.xlane.f32.xlu0 %v302
        %v460 = vpop.xlane.xlu0 %459
        %461 = vadd.xlane.f32.xlu0 %v303
        %v462 = vpop.xlane.xlu0 %461
        %463 = vadd.xlane.f32.xlu0 %v304
        %v464 = vpop.xlane.xlu0 %463
        %465 = vadd.xlane.f32.xlu0 %v305
        %v466 = vpop.xlane.xlu0 %465
        %467 = vadd.xlane.f32.xlu0 %v306
        %v468 = vpop.xlane.xlu0 %467
        %469 = vadd.xlane.f32.xlu0 %v307
        %v470 = vpop.xlane.xlu0 %469
        %471 = vadd.xlane.f32.xlu0 %v308
        %v472 = vpop.xlane.xlu0 %471
        %473 = vadd.xlane.f32.xlu0 %v309
        %v474 = vpop.xlane.xlu0 %473
        %475 = vadd.xlane.f32.xlu0 %v310
        %v476 = vpop.xlane.xlu0 %475
        %477 = vadd.xlane.f32.xlu0 %v311
        %v478 = vpop.xlane.xlu0 %477
        %479 = vadd.xlane.f32.xlu0 %v312
        %v480 = vpop.xlane.xlu0 %479
        %481 = vadd.xlane.f32.xlu0 %v313
        %v482 = vpop.xlane.xlu0 %481
        %483 = vadd.xlane.f32.xlu0 %v314
        %v484 = vpop.xlane.xlu0 %483
        %485 = vadd.xlane.f32.xlu0 %v315
        %v486 = vpop.xlane.xlu0 %485
        %487 = vadd.xlane.f32.xlu0 %v316
        %v488 = vpop.xlane.xlu0 %487
        %489 = vadd.xlane.f32.xlu0 %v317
        %v490 = vpop.xlane.xlu0 %489
        %491 = vadd.xlane.f32.xlu0 %v318
        %v492 = vpop.xlane.xlu0 %491
        %493 = vadd.xlane.f32.xlu0 %v319
        %v494 = vpop.xlane.xlu0 %493
        %495 = vadd.xlane.f32.xlu0 %v320
        %v496 = vpop.xlane.xlu0 %495
        %497 = vadd.xlane.f32.xlu0 %v321
        %v498 = vpop.xlane.xlu0 %497
        %499 = vadd.xlane.f32.xlu0 %v322
        %v500 = vpop.xlane.xlu0 %499
        %501 = vadd.xlane.f32.xlu0 %v323
        %v502 = vpop.xlane.xlu0 %501
        %503 = vadd.xlane.f32.xlu0 %v324
        %v504 = vpop.xlane.xlu0 %503
        %505 = vadd.xlane.f32.xlu0 %v325
        %v506 = vpop.xlane.xlu0 %505
        %507 = vadd.xlane.f32.xlu0 %v326
        %v508 = vpop.xlane.xlu0 %507
        %509 = vadd.xlane.f32.xlu0 %v327
        %v510 = vpop.xlane.xlu0 %509
        %511 = vadd.xlane.f32.xlu0 %v328
        %v512 = vpop.xlane.xlu0 %511
        %513 = vadd.xlane.f32.xlu0 %v329
        %v514 = vpop.xlane.xlu0 %513
        %515 = vadd.xlane.f32.xlu0 %v330
        %v516 = vpop.xlane.xlu0 %515
        %517 = vadd.xlane.f32.xlu0 %v331
        %v518 = vpop.xlane.xlu0 %517
        %519 = vadd.xlane.f32.xlu0 %v332
        %v520 = vpop.xlane.xlu0 %519
        %v521 = vmul.f32 %v334, 0.0078125
        %v522 = vmul.f32 %v336, 0.0078125
        %v523 = vmul.f32 %v338, 0.0078125
        %v524 = vmul.f32 %v340, 0.0078125
        %v525 = vmul.f32 %v342, 0.0078125
        %v526 = vmul.f32 %v344, 0.0078125
        %v527 = vmul.f32 %v346, 0.0078125
        %v528 = vmul.f32 %v348, 0.0078125
        %v529 = vmul.f32 %v350, 0.0078125
        %v530 = vmul.f32 %v352, 0.0078125
        %v531 = vmul.f32 %v354, 0.0078125
        %v532 = vmul.f32 %v356, 0.0078125
        %v533 = vmul.f32 %v358, 0.0078125
        %v534 = vmul.f32 %v360, 0.0078125
        %v535 = vmul.f32 %v362, 0.0078125
        %v536 = vmul.f32 %v364, 0.0078125
        %v537 = vmul.f32 %v366, 0.0078125
        %v538 = vmul.f32 %v368, 0.0078125
        %v539 = vmul.f32 %v370, 0.0078125
        %v540 = vmul.f32 %v372, 0.0078125
        %v541 = vmul.f32 %v374, 0.0078125
        %v542 = vmul.f32 %v376, 0.0078125
        %v543 = vmul.f32 %v378, 0.0078125
        %v544 = vmul.f32 %v380, 0.0078125
        %v545 = vmul.f32 %v382, 0.0078125
        %v546 = vmul.f32 %v384, 0.0078125
        %v547 = vmul.f32 %v386, 0.0078125
        %v548 = vmul.f32 %v388, 0.0078125
        %v549 = vmul.f32 %v390, 0.0078125
        %v550 = vmul.f32 %v392, 0.0078125
        %v551 = vmul.f32 %v394, 0.0078125
        %v552 = vmul.f32 %v396, 0.0078125
        %v553 = vmul.f32 %v398, 0.0078125
        %v554 = vmul.f32 %v400, 0.0078125
        %v555 = vmul.f32 %v402, 0.0078125
        %v556 = vmul.f32 %v404, 0.0078125
        %v557 = vmul.f32 %v406, 0.0078125
        %v558 = vmul.f32 %v408, 0.0078125
        %v559 = vmul.f32 %v410, 0.0078125
        %v560 = vmul.f32 %v412, 0.0078125
        %v561 = vmul.f32 %v414, 0.0078125
        %v562 = vmul.f32 %v416, 0.0078125
        %v563 = vmul.f32 %v418, 0.0078125
        %v564 = vmul.f32 %v420, 0.0078125
        %v565 = vmul.f32 %v422, 0.0078125
        %v566 = vmul.f32 %v424, 0.0078125
        %v567 = vmul.f32 %v426, 0.0078125
        %v568 = vmul.f32 %v428, 0.0078125
        %v569 = vmul.f32 %v430, 0.0078125
        %v570 = vmul.f32 %v432, 0.0078125
        %v571 = vmul.f32 %v434, 0.0078125
        %v572 = vmul.f32 %v436, 0.0078125
        %v573 = vmul.f32 %v438, 0.0078125
        %v574 = vmul.f32 %v440, 0.0078125
        %v575 = vmul.f32 %v442, 0.0078125
        %v576 = vmul.f32 %v444, 0.0078125
        %v577 = vmul.f32 %v446, 0.0078125
        %v578 = vmul.f32 %v448, 0.0078125
        %v579 = vmul.f32 %v450, 0.0078125
        %v580 = vmul.f32 %v452, 0.0078125
        %v581 = vmul.f32 %v454, 0.0078125
        %v582 = vmul.f32 %v456, 0.0078125
        %v583 = vmul.f32 %v458, 0.0078125
        %v584 = vmul.f32 %v460, 0.0078125
        %v585 = vmul.f32 %v462, 0.0078125
        %v586 = vmul.f32 %v464, 0.0078125
        %v587 = vmul.f32 %v466, 0.0078125
        %v588 = vmul.f32 %v468, 0.0078125
        %v589 = vmul.f32 %v470, 0.0078125
        %v590 = vmul.f32 %v472, 0.0078125
        %v591 = vmul.f32 %v474, 0.0078125
        %v592 = vmul.f32 %v476, 0.0078125
        %v593 = vmul.f32 %v478, 0.0078125
        %v594 = vmul.f32 %v480, 0.0078125
        %v595 = vmul.f32 %v482, 0.0078125
        %v596 = vmul.f32 %v484, 0.0078125
        %v597 = vmul.f32 %v486, 0.0078125
        %v598 = vmul.f32 %v488, 0.0078125
        %v599 = vmul.f32 %v490, 0.0078125
        %v600 = vmul.f32 %v492, 0.0078125
        %v601 = vmul.f32 %v494, 0.0078125
        %v602 = vmul.f32 %v496, 0.0078125
        %v603 = vmul.f32 %v498, 0.0078125
        %v604 = vmul.f32 %v500, 0.0078125
        %v605 = vmul.f32 %v502, 0.0078125
        %v606 = vmul.f32 %v504, 0.0078125
        %v607 = vmul.f32 %v506, 0.0078125
        %v608 = vmul.f32 %v508, 0.0078125
        %v609 = vmul.f32 %v510, 0.0078125
        %v610 = vmul.f32 %v512, 0.0078125
        %v611 = vmul.f32 %v514, 0.0078125
        %v612 = vmul.f32 %v516, 0.0078125
        %v613 = vmul.f32 %v518, 0.0078125
        %v614 = vmul.f32 %v520, 0.0078125
        %v615 = vsub.f32 %v239, %v521
        %v616 = vsub.f32 %v240, %v522
        %v617 = vsub.f32 %v241, %v523
        %v618 = vsub.f32 %v242, %v524
        %v619 = vsub.f32 %v243, %v525
        %v620 = vsub.f32 %v244, %v526
        %v621 = vsub.f32 %v245, %v527
        %v622 = vsub.f32 %v246, %v528
        %v623 = vsub.f32 %v247, %v529
        %v624 = vsub.f32 %v248, %v530
        %v625 = vsub.f32 %v249, %v531
        %v626 = vsub.f32 %v250, %v532
        %v627 = vsub.f32 %v251, %v533
        %v628 = vsub.f32 %v252, %v534
        %v629 = vsub.f32 %v253, %v535
        %v630 = vsub.f32 %v254, %v536
        %v631 = vsub.f32 %v255, %v537
        %v632 = vsub.f32 %v256, %v538
        %v633 = vsub.f32 %v257, %v539
        %v634 = vsub.f32 %v258, %v540
        %v635 = vsub.f32 %v259, %v541
        %v636 = vsub.f32 %v260, %v542
        %v637 = vsub.f32 %v261, %v543
        %v638 = vsub.f32 %v262, %v544
        %v639 = vsub.f32 %v263, %v545
        %v640 = vsub.f32 %v264, %v546
        %v641 = vsub.f32 %v265, %v547
        %v642 = vsub.f32 %v266, %v548
        %v643 = vsub.f32 %v267, %v549
        %v644 = vsub.f32 %v268, %v550
        %v645 = vsub.f32 %v269, %v551
        %v646 = vsub.f32 %v270, %v552
        %v647 = vsub.f32 %v271, %v553
        %v648 = vsub.f32 %v272, %v554
        %v649 = vsub.f32 %v273, %v555
        %v650 = vsub.f32 %v274, %v556
        %v651 = vsub.f32 %v275, %v557
        %v652 = vsub.f32 %v276, %v558
        %v653 = vsub.f32 %v277, %v559
        %v654 = vsub.f32 %v278, %v560
        %v655 = vsub.f32 %v279, %v561
        %v656 = vsub.f32 %v280, %v562
        %v657 = vsub.f32 %v281, %v563
        %v658 = vsub.f32 %v282, %v564
        %v659 = vsub.f32 %v283, %v565
        %v660 = vsub.f32 %v284, %v566
        %v661 = vsub.f32 %v285, %v567
        %v662 = vsub.f32 %v286, %v568
        %v663 = vsub.f32 %v287, %v569
        %v664 = vsub.f32 %v288, %v570
        %v665 = vsub.f32 %v289, %v571
        %v666 = vsub.f32 %v290, %v572
        %v667 = vsub.f32 %v291, %v573
        %v668 = vsub.f32 %v292, %v574
        %v669 = vsub.f32 %v293, %v575
        %v670 = vsub.f32 %v294, %v576
        %v671 = vsub.f32 %v295, %v577
        %v672 = vsub.f32 %v296, %v578
        %v673 = vsub.f32 %v297, %v579
        %v674 = vsub.f32 %v298, %v580
        %v675 = vsub.f32 %v299, %v581
        %v676 = vsub.f32 %v300, %v582
        %v677 = vsub.f32 %v301, %v583
        %v678 = vsub.f32 %v302, %v584
        %v679 = vsub.f32 %v303, %v585
        %v680 = vsub.f32 %v304, %v586
        %v681 = vsub.f32 %v305, %v587
        %v682 = vsub.f32 %v306, %v588
        %v683 = vsub.f32 %v307, %v589
        %v684 = vsub.f32 %v308, %v590
        %v685 = vsub.f32 %v309, %v591
        %v686 = vsub.f32 %v310, %v592
        %v687 = vsub.f32 %v311, %v593
        %v688 = vsub.f32 %v312, %v594
        %v689 = vsub.f32 %v313, %v595
        %v690 = vsub.f32 %v314, %v596
        %v691 = vsub.f32 %v315, %v597
        %v692 = vsub.f32 %v316, %v598
        %v693 = vsub.f32 %v317, %v599
        %v694 = vsub.f32 %v318, %v600
        %v695 = vsub.f32 %v319, %v601
        %v696 = vsub.f32 %v320, %v602
        %v697 = vsub.f32 %v321, %v603
        %v698 = vsub.f32 %v322, %v604
        %v699 = vsub.f32 %v323, %v605
        %v700 = vsub.f32 %v324, %v606
        %v701 = vsub.f32 %v325, %v607
        %v702 = vsub.f32 %v326, %v608
        %v703 = vsub.f32 %v327, %v609
        %v704 = vsub.f32 %v328, %v610
        %v705 = vsub.f32 %v329, %v611
        %v706 = vsub.f32 %v330, %v612
        %v707 = vsub.f32 %v331, %v613
        %v708 = vsub.f32 %v332, %v614
        %v709 = vmul.f32 %v615, %v615
        %v710 = vmul.f32 %v616, %v616
        %v711 = vmul.f32 %v617, %v617
        %v712 = vmul.f32 %v618, %v618
        %v713 = vmul.f32 %v619, %v619
        %v714 = vmul.f32 %v620, %v620
        %v715 = vmul.f32 %v621, %v621
        %v716 = vmul.f32 %v622, %v622
        %v717 = vmul.f32 %v623, %v623
        %v718 = vmul.f32 %v624, %v624
        %v719 = vmul.f32 %v625, %v625
        %v720 = vmul.f32 %v626, %v626
        %v721 = vmul.f32 %v627, %v627
        %v722 = vmul.f32 %v628, %v628
        %v723 = vmul.f32 %v629, %v629
        %v724 = vmul.f32 %v630, %v630
        %v725 = vmul.f32 %v631, %v631
        %v726 = vmul.f32 %v632, %v632
        %v727 = vmul.f32 %v633, %v633
        %v728 = vmul.f32 %v634, %v634
        %v729 = vmul.f32 %v635, %v635
        %v730 = vmul.f32 %v636, %v636
        %v731 = vmul.f32 %v637, %v637
        %v732 = vmul.f32 %v638, %v638
        %v733 = vmul.f32 %v639, %v639
        %v734 = vmul.f32 %v640, %v640
        %v735 = vmul.f32 %v641, %v641
        %v736 = vmul.f32 %v642, %v642
        %v737 = vmul.f32 %v643, %v643
        %v738 = vmul.f32 %v644, %v644
        %v739 = vmul.f32 %v645, %v645
        %v740 = vmul.f32 %v646, %v646
        %v741 = vmul.f32 %v647, %v647
        %v742 = vmul.f32 %v648, %v648
        %v743 = vmul.f32 %v649, %v649
        %v744 = vmul.f32 %v650, %v650
        %v745 = vmul.f32 %v651, %v651
        %v746 = vmul.f32 %v652, %v652
        %v747 = vmul.f32 %v653, %v653
        %v748 = vmul.f32 %v654, %v654
        %v749 = vmul.f32 %v655, %v655
        %v750 = vmul.f32 %v656, %v656
        %v751 = vmul.f32 %v657, %v657
        %v752 = vmul.f32 %v658, %v658
        %v753 = vmul.f32 %v659, %v659
        %v754 = vmul.f32 %v660, %v660
        %v755 = vmul.f32 %v661, %v661
        %v756 = vmul.f32 %v662, %v662
        %v757 = vmul.f32 %v663, %v663
        %v758 = vmul.f32 %v664, %v664
        %v759 = vmul.f32 %v665, %v665
        %v760 = vmul.f32 %v666, %v666
        %v761 = vmul.f32 %v667, %v667
        %v762 = vmul.f32 %v668, %v668
        %v763 = vmul.f32 %v669, %v669
        %v764 = vmul.f32 %v670, %v670
        %v765 = vmul.f32 %v671, %v671
        %v766 = vmul.f32 %v672, %v672
        %v767 = vmul.f32 %v673, %v673
        %v768 = vmul.f32 %v674, %v674
        %v769 = vmul.f32 %v675, %v675
        %v770 = vmul.f32 %v676, %v676
        %v771 = vmul.f32 %v677, %v677
        %v772 = vmul.f32 %v678, %v678
        %v773 = vmul.f32 %v679, %v679
        %v774 = vmul.f32 %v680, %v680
        %v775 = vmul.f32 %v681, %v681
        %v776 = vmul.f32 %v682, %v682
        %v777 = vmul.f32 %v683, %v683
        %v778 = vmul.f32 %v684, %v684
        %v779 = vmul.f32 %v685, %v685
        %v780 = vmul.f32 %v686, %v686
        %v781 = vmul.f32 %v687, %v687
        %v782 = vmul.f32 %v688, %v688
        %v783 = vmul.f32 %v689, %v689
        %v784 = vmul.f32 %v690, %v690
        %v785 = vmul.f32 %v691, %v691
        %v786 = vmul.f32 %v692, %v692
        %v787 = vmul.f32 %v693, %v693
        %v788 = vmul.f32 %v694, %v694
        %v789 = vmul.f32 %v695, %v695
        %v790 = vmul.f32 %v696, %v696
        %v791 = vmul.f32 %v697, %v697
        %v792 = vmul.f32 %v698, %v698
        %v793 = vmul.f32 %v699, %v699
        %v794 = vmul.f32 %v700, %v700
        %v795 = vmul.f32 %v701, %v701
        %v796 = vmul.f32 %v702, %v702
        %v797 = vmul.f32 %v703, %v703
        %v798 = vmul.f32 %v704, %v704
        %v799 = vmul.f32 %v705, %v705
        %v800 = vmul.f32 %v706, %v706
        %v801 = vmul.f32 %v707, %v707
        %v802 = vmul.f32 %v708, %v708
        %803 = vadd.xlane.f32.xlu0 %v709
        %v804 = vpop.xlane.xlu0 %803
        %805 = vadd.xlane.f32.xlu0 %v710
        %v806 = vpop.xlane.xlu0 %805
        %807 = vadd.xlane.f32.xlu0 %v711
        %v808 = vpop.xlane.xlu0 %807
        %809 = vadd.xlane.f32.xlu0 %v712
        %v810 = vpop.xlane.xlu0 %809
        %811 = vadd.xlane.f32.xlu0 %v713
        %v812 = vpop.xlane.xlu0 %811
        %813 = vadd.xlane.f32.xlu0 %v714
        %v814 = vpop.xlane.xlu0 %813
        %815 = vadd.xlane.f32.xlu0 %v715
        %v816 = vpop.xlane.xlu0 %815
        %817 = vadd.xlane.f32.xlu0 %v716
        %v818 = vpop.xlane.xlu0 %817
        %819 = vadd.xlane.f32.xlu0 %v717
        %v820 = vpop.xlane.xlu0 %819
        %821 = vadd.xlane.f32.xlu0 %v718
        %v822 = vpop.xlane.xlu0 %821
        %823 = vadd.xlane.f32.xlu0 %v719
        %v824 = vpop.xlane.xlu0 %823
        %825 = vadd.xlane.f32.xlu0 %v720
        %v826 = vpop.xlane.xlu0 %825
        %827 = vadd.xlane.f32.xlu0 %v721
        %v828 = vpop.xlane.xlu0 %827
        %829 = vadd.xlane.f32.xlu0 %v722
        %v830 = vpop.xlane.xlu0 %829
        %831 = vadd.xlane.f32.xlu0 %v723
        %v832 = vpop.xlane.xlu0 %831
        %833 = vadd.xlane.f32.xlu0 %v724
        %v834 = vpop.xlane.xlu0 %833
        %835 = vadd.xlane.f32.xlu0 %v725
        %v836 = vpop.xlane.xlu0 %835
        %837 = vadd.xlane.f32.xlu0 %v726
        %v838 = vpop.xlane.xlu0 %837
        %839 = vadd.xlane.f32.xlu0 %v727
        %v840 = vpop.xlane.xlu0 %839
        %841 = vadd.xlane.f32.xlu0 %v728
        %v842 = vpop.xlane.xlu0 %841
        %843 = vadd.xlane.f32.xlu0 %v729
        %v844 = vpop.xlane.xlu0 %843
        %845 = vadd.xlane.f32.xlu0 %v730
        %v846 = vpop.xlane.xlu0 %845
        %847 = vadd.xlane.f32.xlu0 %v731
        %v848 = vpop.xlane.xlu0 %847
        %849 = vadd.xlane.f32.xlu0 %v732
        %v850 = vpop.xlane.xlu0 %849
        %851 = vadd.xlane.f32.xlu0 %v733
        %v852 = vpop.xlane.xlu0 %851
        %853 = vadd.xlane.f32.xlu0 %v734
        %v854 = vpop.xlane.xlu0 %853
        %855 = vadd.xlane.f32.xlu0 %v735
        %v856 = vpop.xlane.xlu0 %855
        %857 = vadd.xlane.f32.xlu0 %v736
        %v858 = vpop.xlane.xlu0 %857
        %859 = vadd.xlane.f32.xlu0 %v737
        %v860 = vpop.xlane.xlu0 %859
        %861 = vadd.xlane.f32.xlu0 %v738
        %v862 = vpop.xlane.xlu0 %861
        %863 = vadd.xlane.f32.xlu0 %v739
        %v864 = vpop.xlane.xlu0 %863
        %865 = vadd.xlane.f32.xlu0 %v740
        %v866 = vpop.xlane.xlu0 %865
        %867 = vadd.xlane.f32.xlu0 %v741
        %v868 = vpop.xlane.xlu0 %867
        %869 = vadd.xlane.f32.xlu0 %v742
        %v870 = vpop.xlane.xlu0 %869
        %871 = vadd.xlane.f32.xlu0 %v743
        %v872 = vpop.xlane.xlu0 %871
        %873 = vadd.xlane.f32.xlu0 %v744
        %v874 = vpop.xlane.xlu0 %873
        %875 = vadd.xlane.f32.xlu0 %v745
        %v876 = vpop.xlane.xlu0 %875
        %877 = vadd.xlane.f32.xlu0 %v746
        %v878 = vpop.xlane.xlu0 %877
        %879 = vadd.xlane.f32.xlu0 %v747
        %v880 = vpop.xlane.xlu0 %879
        %881 = vadd.xlane.f32.xlu0 %v748
        %v882 = vpop.xlane.xlu0 %881
        %883 = vadd.xlane.f32.xlu0 %v749
        %v884 = vpop.xlane.xlu0 %883
        %885 = vadd.xlane.f32.xlu0 %v750
        %v886 = vpop.xlane.xlu0 %885
        %887 = vadd.xlane.f32.xlu0 %v751
        %v888 = vpop.xlane.xlu0 %887
        %889 = vadd.xlane.f32.xlu0 %v752
        %v890 = vpop.xlane.xlu0 %889
        %891 = vadd.xlane.f32.xlu0 %v753
        %v892 = vpop.xlane.xlu0 %891
        %893 = vadd.xlane.f32.xlu0 %v754
        %v894 = vpop.xlane.xlu0 %893
        %895 = vadd.xlane.f32.xlu0 %v755
        %v896 = vpop.xlane.xlu0 %895
        %897 = vadd.xlane.f32.xlu0 %v756
        %v898 = vpop.xlane.xlu0 %897
        %899 = vadd.xlane.f32.xlu0 %v757
        %v900 = vpop.xlane.xlu0 %899
        %901 = vadd.xlane.f32.xlu0 %v758
        %v902 = vpop.xlane.xlu0 %901
        %903 = vadd.xlane.f32.xlu0 %v759
        %v904 = vpop.xlane.xlu0 %903
        %905 = vadd.xlane.f32.xlu0 %v760
        %v906 = vpop.xlane.xlu0 %905
        %907 = vadd.xlane.f32.xlu0 %v761
        %v908 = vpop.xlane.xlu0 %907
        %909 = vadd.xlane.f32.xlu0 %v762
        %v910 = vpop.xlane.xlu0 %909
        %911 = vadd.xlane.f32.xlu0 %v763
        %v912 = vpop.xlane.xlu0 %911
        %913 = vadd.xlane.f32.xlu0 %v764
        %v914 = vpop.xlane.xlu0 %913
        %915 = vadd.xlane.f32.xlu0 %v765
        %v916 = vpop.xlane.xlu0 %915
        %917 = vadd.xlane.f32.xlu0 %v766
        %v918 = vpop.xlane.xlu0 %917
        %919 = vadd.xlane.f32.xlu0 %v767
        %v920 = vpop.xlane.xlu0 %919
        %921 = vadd.xlane.f32.xlu0 %v768
        %v922 = vpop.xlane.xlu0 %921
        %923 = vadd.xlane.f32.xlu0 %v769
        %v924 = vpop.xlane.xlu0 %923
        %925 = vadd.xlane.f32.xlu0 %v770
        %v926 = vpop.xlane.xlu0 %925
        %927 = vadd.xlane.f32.xlu0 %v771
        %v928 = vpop.xlane.xlu0 %927
        %929 = vadd.xlane.f32.xlu0 %v772
        %v930 = vpop.xlane.xlu0 %929
        %931 = vadd.xlane.f32.xlu0 %v773
        %v932 = vpop.xlane.xlu0 %931
        %933 = vadd.xlane.f32.xlu0 %v774
        %v934 = vpop.xlane.xlu0 %933
        %935 = vadd.xlane.f32.xlu0 %v775
        %v936 = vpop.xlane.xlu0 %935
        %937 = vadd.xlane.f32.xlu0 %v776
        %v938 = vpop.xlane.xlu0 %937
        %939 = vadd.xlane.f32.xlu0 %v777
        %v940 = vpop.xlane.xlu0 %939
        %941 = vadd.xlane.f32.xlu0 %v778
        %v942 = vpop.xlane.xlu0 %941
        %943 = vadd.xlane.f32.xlu0 %v779
        %v944 = vpop.xlane.xlu0 %943
        %945 = vadd.xlane.f32.xlu0 %v780
        %v946 = vpop.xlane.xlu0 %945
        %947 = vadd.xlane.f32.xlu0 %v781
        %v948 = vpop.xlane.xlu0 %947
        %949 = vadd.xlane.f32.xlu0 %v782
        %v950 = vpop.xlane.xlu0 %949
        %951 = vadd.xlane.f32.xlu0 %v783
        %v952 = vpop.xlane.xlu0 %951
        %953 = vadd.xlane.f32.xlu0 %v784
        %v954 = vpop.xlane.xlu0 %953
        %955 = vadd.xlane.f32.xlu0 %v785
        %v956 = vpop.xlane.xlu0 %955
        %957 = vadd.xlane.f32.xlu0 %v786
        %v958 = vpop.xlane.xlu0 %957
        %959 = vadd.xlane.f32.xlu0 %v787
        %v960 = vpop.xlane.xlu0 %959
        %961 = vadd.xlane.f32.xlu0 %v788
        %v962 = vpop.xlane.xlu0 %961
        %963 = vadd.xlane.f32.xlu0 %v789
        %v964 = vpop.xlane.xlu0 %963
        %965 = vadd.xlane.f32.xlu0 %v790
        %v966 = vpop.xlane.xlu0 %965
        %967 = vadd.xlane.f32.xlu0 %v791
        %v968 = vpop.xlane.xlu0 %967
        %969 = vadd.xlane.f32.xlu0 %v792
        %v970 = vpop.xlane.xlu0 %969
        %971 = vadd.xlane.f32.xlu0 %v793
        %v972 = vpop.xlane.xlu0 %971
        %973 = vadd.xlane.f32.xlu0 %v794
        %v974 = vpop.xlane.xlu0 %973
        %975 = vadd.xlane.f32.xlu0 %v795
        %v976 = vpop.xlane.xlu0 %975
        %977 = vadd.xlane.f32.xlu0 %v796
        %v978 = vpop.xlane.xlu0 %977
        %979 = vadd.xlane.f32.xlu0 %v797
        %v980 = vpop.xlane.xlu0 %979
        %981 = vadd.xlane.f32.xlu0 %v798
        %v982 = vpop.xlane.xlu0 %981
        %983 = vadd.xlane.f32.xlu0 %v799
        %v984 = vpop.xlane.xlu0 %983
        %985 = vadd.xlane.f32.xlu0 %v800
        %v986 = vpop.xlane.xlu0 %985
        %987 = vadd.xlane.f32.xlu0 %v801
        %v988 = vpop.xlane.xlu0 %987
        %989 = vadd.xlane.f32.xlu0 %v802
        %v990 = vpop.xlane.xlu0 %989
        %v991 = vmul.f32 %v804, 0.0078125
        %v992 = vmul.f32 %v806, 0.0078125
        %v993 = vmul.f32 %v808, 0.0078125
        %v994 = vmul.f32 %v810, 0.0078125
        %v995 = vmul.f32 %v812, 0.0078125
        %v996 = vmul.f32 %v814, 0.0078125
        %v997 = vmul.f32 %v816, 0.0078125
        %v998 = vmul.f32 %v818, 0.0078125
        %v999 = vmul.f32 %v820, 0.0078125
        %v1000 = vmul.f32 %v822, 0.0078125
        %v1001 = vmul.f32 %v824, 0.0078125
        %v1002 = vmul.f32 %v826, 0.0078125
        %v1003 = vmul.f32 %v828, 0.0078125
        %v1004 = vmul.f32 %v830, 0.0078125
        %v1005 = vmul.f32 %v832, 0.0078125
        %v1006 = vmul.f32 %v834, 0.0078125
        %v1007 = vmul.f32 %v836, 0.0078125
        %v1008 = vmul.f32 %v838, 0.0078125
        %v1009 = vmul.f32 %v840, 0.0078125
        %v1010 = vmul.f32 %v842, 0.0078125
        %v1011 = vmul.f32 %v844, 0.0078125
        %v1012 = vmul.f32 %v846, 0.0078125
        %v1013 = vmul.f32 %v848, 0.0078125
        %v1014 = vmul.f32 %v850, 0.0078125
        %v1015 = vmul.f32 %v852, 0.0078125
        %v1016 = vmul.f32 %v854, 0.0078125
        %v1017 = vmul.f32 %v856, 0.0078125
        %v1018 = vmul.f32 %v858, 0.0078125
        %v1019 = vmul.f32 %v860, 0.0078125
        %v1020 = vmul.f32 %v862, 0.0078125
        %v1021 = vmul.f32 %v864, 0.0078125
        %v1022 = vmul.f32 %v866, 0.0078125
        %v1023 = vmul.f32 %v868, 0.0078125
        %v1024 = vmul.f32 %v870, 0.0078125
        %v1025 = vmul.f32 %v872, 0.0078125
        %v1026 = vmul.f32 %v874, 0.0078125
        %v1027 = vmul.f32 %v876, 0.0078125
        %v1028 = vmul.f32 %v878, 0.0078125
        %v1029 = vmul.f32 %v880, 0.0078125
        %v1030 = vmul.f32 %v882, 0.0078125
        %v1031 = vmul.f32 %v884, 0.0078125
        %v1032 = vmul.f32 %v886, 0.0078125
        %v1033 = vmul.f32 %v888, 0.0078125
        %v1034 = vmul.f32 %v890, 0.0078125
        %v1035 = vmul.f32 %v892, 0.0078125
        %v1036 = vmul.f32 %v894, 0.0078125
        %v1037 = vmul.f32 %v896, 0.0078125
        %v1038 = vmul.f32 %v898, 0.0078125
        %v1039 = vmul.f32 %v900, 0.0078125
        %v1040 = vmul.f32 %v902, 0.0078125
        %v1041 = vmul.f32 %v904, 0.0078125
        %v1042 = vmul.f32 %v906, 0.0078125
        %v1043 = vmul.f32 %v908, 0.0078125
        %v1044 = vmul.f32 %v910, 0.0078125
        %v1045 = vmul.f32 %v912, 0.0078125
        %v1046 = vmul.f32 %v914, 0.0078125
        %v1047 = vmul.f32 %v916, 0.0078125
        %v1048 = vmul.f32 %v918, 0.0078125
        %v1049 = vmul.f32 %v920, 0.0078125
        %v1050 = vmul.f32 %v922, 0.0078125
        %v1051 = vmul.f32 %v924, 0.0078125
        %v1052 = vmul.f32 %v926, 0.0078125
        %v1053 = vmul.f32 %v928, 0.0078125
        %v1054 = vmul.f32 %v930, 0.0078125
        %v1055 = vmul.f32 %v932, 0.0078125
        %v1056 = vmul.f32 %v934, 0.0078125
        %v1057 = vmul.f32 %v936, 0.0078125
        %v1058 = vmul.f32 %v938, 0.0078125
        %v1059 = vmul.f32 %v940, 0.0078125
        %v1060 = vmul.f32 %v942, 0.0078125
        %v1061 = vmul.f32 %v944, 0.0078125
        %v1062 = vmul.f32 %v946, 0.0078125
        %v1063 = vmul.f32 %v948, 0.0078125
        %v1064 = vmul.f32 %v950, 0.0078125
        %v1065 = vmul.f32 %v952, 0.0078125
        %v1066 = vmul.f32 %v954, 0.0078125
        %v1067 = vmul.f32 %v956, 0.0078125
        %v1068 = vmul.f32 %v958, 0.0078125
        %v1069 = vmul.f32 %v960, 0.0078125
        %v1070 = vmul.f32 %v962, 0.0078125
        %v1071 = vmul.f32 %v964, 0.0078125
        %v1072 = vmul.f32 %v966, 0.0078125
        %v1073 = vmul.f32 %v968, 0.0078125
        %v1074 = vmul.f32 %v970, 0.0078125
        %v1075 = vmul.f32 %v972, 0.0078125
        %v1076 = vmul.f32 %v974, 0.0078125
        %v1077 = vmul.f32 %v976, 0.0078125
        %v1078 = vmul.f32 %v978, 0.0078125
        %v1079 = vmul.f32 %v980, 0.0078125
        %v1080 = vmul.f32 %v982, 0.0078125
        %v1081 = vmul.f32 %v984, 0.0078125
        %v1082 = vmul.f32 %v986, 0.0078125
        %v1083 = vmul.f32 %v988, 0.0078125
        %v1084 = vmul.f32 %v990, 0.0078125
        %v1085 = vadd.f32 %v991, 1e-05
        %v1086 = vadd.f32 %v992, 1e-05
        %v1087 = vadd.f32 %v993, 1e-05
        %v1088 = vadd.f32 %v994, 1e-05
        %v1089 = vadd.f32 %v995, 1e-05
        %v1090 = vadd.f32 %v996, 1e-05
        %v1091 = vadd.f32 %v997, 1e-05
        %v1092 = vadd.f32 %v998, 1e-05
        %v1093 = vadd.f32 %v999, 1e-05
        %v1094 = vadd.f32 %v1000, 1e-05
        %v1095 = vadd.f32 %v1001, 1e-05
        %v1096 = vadd.f32 %v1002, 1e-05
        %v1097 = vadd.f32 %v1003, 1e-05
        %v1098 = vadd.f32 %v1004, 1e-05
        %v1099 = vadd.f32 %v1005, 1e-05
        %v1100 = vadd.f32 %v1006, 1e-05
        %v1101 = vadd.f32 %v1007, 1e-05
        %v1102 = vadd.f32 %v1008, 1e-05
        %v1103 = vadd.f32 %v1009, 1e-05
        %v1104 = vadd.f32 %v1010, 1e-05
        %v1105 = vadd.f32 %v1011, 1e-05
        %v1106 = vadd.f32 %v1012, 1e-05
        %v1107 = vadd.f32 %v1013, 1e-05
        %v1108 = vadd.f32 %v1014, 1e-05
        %v1109 = vadd.f32 %v1015, 1e-05
        %v1110 = vadd.f32 %v1016, 1e-05
        %v1111 = vadd.f32 %v1017, 1e-05
        %v1112 = vadd.f32 %v1018, 1e-05
        %v1113 = vadd.f32 %v1019, 1e-05
        %v1114 = vadd.f32 %v1020, 1e-05
        %v1115 = vadd.f32 %v1021, 1e-05
        %v1116 = vadd.f32 %v1022, 1e-05
        %v1117 = vadd.f32 %v1023, 1e-05
        %v1118 = vadd.f32 %v1024, 1e-05
        %v1119 = vadd.f32 %v1025, 1e-05
        %v1120 = vadd.f32 %v1026, 1e-05
        %v1121 = vadd.f32 %v1027, 1e-05
        %v1122 = vadd.f32 %v1028, 1e-05
        %v1123 = vadd.f32 %v1029, 1e-05
        %v1124 = vadd.f32 %v1030, 1e-05
        %v1125 = vadd.f32 %v1031, 1e-05
        %v1126 = vadd.f32 %v1032, 1e-05
        %v1127 = vadd.f32 %v1033, 1e-05
        %v1128 = vadd.f32 %v1034, 1e-05
        %v1129 = vadd.f32 %v1035, 1e-05
        %v1130 = vadd.f32 %v1036, 1e-05
        %v1131 = vadd.f32 %v1037, 1e-05
        %v1132 = vadd.f32 %v1038, 1e-05
        %v1133 = vadd.f32 %v1039, 1e-05
        %v1134 = vadd.f32 %v1040, 1e-05
        %v1135 = vadd.f32 %v1041, 1e-05
        %v1136 = vadd.f32 %v1042, 1e-05
        %v1137 = vadd.f32 %v1043, 1e-05
        %v1138 = vadd.f32 %v1044, 1e-05
        %v1139 = vadd.f32 %v1045, 1e-05
        %v1140 = vadd.f32 %v1046, 1e-05
        %v1141 = vadd.f32 %v1047, 1e-05
        %v1142 = vadd.f32 %v1048, 1e-05
        %v1143 = vadd.f32 %v1049, 1e-05
        %v1144 = vadd.f32 %v1050, 1e-05
        %v1145 = vadd.f32 %v1051, 1e-05
        %v1146 = vadd.f32 %v1052, 1e-05
        %v1147 = vadd.f32 %v1053, 1e-05
        %v1148 = vadd.f32 %v1054, 1e-05
        %v1149 = vadd.f32 %v1055, 1e-05
        %v1150 = vadd.f32 %v1056, 1e-05
        %v1151 = vadd.f32 %v1057, 1e-05
        %v1152 = vadd.f32 %v1058, 1e-05
        %v1153 = vadd.f32 %v1059, 1e-05
        %v1154 = vadd.f32 %v1060, 1e-05
        %v1155 = vadd.f32 %v1061, 1e-05
        %v1156 = vadd.f32 %v1062, 1e-05
        %v1157 = vadd.f32 %v1063, 1e-05
        %v1158 = vadd.f32 %v1064, 1e-05
        %v1159 = vadd.f32 %v1065, 1e-05
        %v1160 = vadd.f32 %v1066, 1e-05
        %v1161 = vadd.f32 %v1067, 1e-05
        %v1162 = vadd.f32 %v1068, 1e-05
        %v1163 = vadd.f32 %v1069, 1e-05
        %v1164 = vadd.f32 %v1070, 1e-05
        %v1165 = vadd.f32 %v1071, 1e-05
        %v1166 = vadd.f32 %v1072, 1e-05
        %v1167 = vadd.f32 %v1073, 1e-05
        %v1168 = vadd.f32 %v1074, 1e-05
        %v1169 = vadd.f32 %v1075, 1e-05
        %v1170 = vadd.f32 %v1076, 1e-05
        %v1171 = vadd.f32 %v1077, 1e-05
        %v1172 = vadd.f32 %v1078, 1e-05
        %v1173 = vadd.f32 %v1079, 1e-05
        %v1174 = vadd.f32 %v1080, 1e-05
        %v1175 = vadd.f32 %v1081, 1e-05
        %v1176 = vadd.f32 %v1082, 1e-05
        %v1177 = vadd.f32 %v1083, 1e-05
        %v1178 = vadd.f32 %v1084, 1e-05
        %v1179 = vrsqrt.pop %v1085
        %v1180 = vrsqrt.pop %v1086
        %v1181 = vrsqrt.pop %v1087
        %v1182 = vrsqrt.pop %v1088
        %v1183 = vrsqrt.pop %v1089
        %v1184 = vrsqrt.pop %v1090
        %v1185 = vrsqrt.pop %v1091
        %v1186 = vrsqrt.pop %v1092
        %v1187 = vrsqrt.pop %v1093
        %v1188 = vrsqrt.pop %v1094
        %v1189 = vrsqrt.pop %v1095
        %v1190 = vrsqrt.pop %v1096
        %v1191 = vrsqrt.pop %v1097
        %v1192 = vrsqrt.pop %v1098
        %v1193 = vrsqrt.pop %v1099
        %v1194 = vrsqrt.pop %v1100
        %v1195 = vrsqrt.pop %v1101
        %v1196 = vrsqrt.pop %v1102
        %v1197 = vrsqrt.pop %v1103
        %v1198 = vrsqrt.pop %v1104
        %v1199 = vrsqrt.pop %v1105
        %v1200 = vrsqrt.pop %v1106
        %v1201 = vrsqrt.pop %v1107
        %v1202 = vrsqrt.pop %v1108
        %v1203 = vrsqrt.pop %v1109
        %v1204 = vrsqrt.pop %v1110
        %v1205 = vrsqrt.pop %v1111
        %v1206 = vrsqrt.pop %v1112
        %v1207 = vrsqrt.pop %v1113
        %v1208 = vrsqrt.pop %v1114
        %v1209 = vrsqrt.pop %v1115
        %v1210 = vrsqrt.pop %v1116
        %v1211 = vrsqrt.pop %v1117
        %v1212 = vrsqrt.pop %v1118
        %v1213 = vrsqrt.pop %v1119
        %v1214 = vrsqrt.pop %v1120
        %v1215 = vrsqrt.pop %v1121
        %v1216 = vrsqrt.pop %v1122
        %v1217 = vrsqrt.pop %v1123
        %v1218 = vrsqrt.pop %v1124
        %v1219 = vrsqrt.pop %v1125
        %v1220 = vrsqrt.pop %v1126
        %v1221 = vrsqrt.pop %v1127
        %v1222 = vrsqrt.pop %v1128
        %v1223 = vrsqrt.pop %v1129
        %v1224 = vrsqrt.pop %v1130
        %v1225 = vrsqrt.pop %v1131
        %v1226 = vrsqrt.pop %v1132
        %v1227 = vrsqrt.pop %v1133
        %v1228 = vrsqrt.pop %v1134
        %v1229 = vrsqrt.pop %v1135
        %v1230 = vrsqrt.pop %v1136
        %v1231 = vrsqrt.pop %v1137
        %v1232 = vrsqrt.pop %v1138
        %v1233 = vrsqrt.pop %v1139
        %v1234 = vrsqrt.pop %v1140
        %v1235 = vrsqrt.pop %v1141
        %v1236 = vrsqrt.pop %v1142
        %v1237 = vrsqrt.pop %v1143
        %v1238 = vrsqrt.pop %v1144
        %v1239 = vrsqrt.pop %v1145
        %v1240 = vrsqrt.pop %v1146
        %v1241 = vrsqrt.pop %v1147
        %v1242 = vrsqrt.pop %v1148
        %v1243 = vrsqrt.pop %v1149
        %v1244 = vrsqrt.pop %v1150
        %v1245 = vrsqrt.pop %v1151
        %v1246 = vrsqrt.pop %v1152
        %v1247 = vrsqrt.pop %v1153
        %v1248 = vrsqrt.pop %v1154
        %v1249 = vrsqrt.pop %v1155
        %v1250 = vrsqrt.pop %v1156
        %v1251 = vrsqrt.pop %v1157
        %v1252 = vrsqrt.pop %v1158
        %v1253 = vrsqrt.pop %v1159
        %v1254 = vrsqrt.pop %v1160
        %v1255 = vrsqrt.pop %v1161
        %v1256 = vrsqrt.pop %v1162
        %v1257 = vrsqrt.pop %v1163
        %v1258 = vrsqrt.pop %v1164
        %v1259 = vrsqrt.pop %v1165
        %v1260 = vrsqrt.pop %v1166
        %v1261 = vrsqrt.pop %v1167
        %v1262 = vrsqrt.pop %v1168
        %v1263 = vrsqrt.pop %v1169
        %v1264 = vrsqrt.pop %v1170
        %v1265 = vrsqrt.pop %v1171
        %v1266 = vrsqrt.pop %v1172
        %v1267 = vrsqrt.pop %v1173
        %v1268 = vrsqrt.pop %v1174
        %v1269 = vrsqrt.pop %v1175
        %v1270 = vrsqrt.pop %v1176
        %v1271 = vrsqrt.pop %v1177
        %v1272 = vrsqrt.pop %v1178
        %v1273 = vmul.f32 %v615, %v1179
        %v1274 = vmul.f32 %v616, %v1180
        %v1275 = vmul.f32 %v617, %v1181
        %v1276 = vmul.f32 %v618, %v1182
        %v1277 = vmul.f32 %v619, %v1183
        %v1278 = vmul.f32 %v620, %v1184
        %v1279 = vmul.f32 %v621, %v1185
        %v1280 = vmul.f32 %v622, %v1186
        %v1281 = vmul.f32 %v623, %v1187
        %v1282 = vmul.f32 %v624, %v1188
        %v1283 = vmul.f32 %v625, %v1189
        %v1284 = vmul.f32 %v626, %v1190
        %v1285 = vmul.f32 %v627, %v1191
        %v1286 = vmul.f32 %v628, %v1192
        %v1287 = vmul.f32 %v629, %v1193
        %v1288 = vmul.f32 %v630, %v1194
        %v1289 = vmul.f32 %v631, %v1195
        %v1290 = vmul.f32 %v632, %v1196
        %v1291 = vmul.f32 %v633, %v1197
        %v1292 = vmul.f32 %v634, %v1198
        %v1293 = vmul.f32 %v635, %v1199
        %v1294 = vmul.f32 %v636, %v1200
        %v1295 = vmul.f32 %v637, %v1201
        %v1296 = vmul.f32 %v638, %v1202
        %v1297 = vmul.f32 %v639, %v1203
        %v1298 = vmul.f32 %v640, %v1204
        %v1299 = vmul.f32 %v641, %v1205
        %v1300 = vmul.f32 %v642, %v1206
        %v1301 = vmul.f32 %v643, %v1207
        %v1302 = vmul.f32 %v644, %v1208
        %v1303 = vmul.f32 %v645, %v1209
        %v1304 = vmul.f32 %v646, %v1210
        %v1305 = vmul.f32 %v647, %v1211
        %v1306 = vmul.f32 %v648, %v1212
        %v1307 = vmul.f32 %v649, %v1213
        %v1308 = vmul.f32 %v650, %v1214
        %v1309 = vmul.f32 %v651, %v1215
        %v1310 = vmul.f32 %v652, %v1216
        %v1311 = vmul.f32 %v653, %v1217
        %v1312 = vmul.f32 %v654, %v1218
        %v1313 = vmul.f32 %v655, %v1219
        %v1314 = vmul.f32 %v656, %v1220
        %v1315 = vmul.f32 %v657, %v1221
        %v1316 = vmul.f32 %v658, %v1222
        %v1317 = vmul.f32 %v659, %v1223
        %v1318 = vmul.f32 %v660, %v1224
        %v1319 = vmul.f32 %v661, %v1225
        %v1320 = vmul.f32 %v662, %v1226
        %v1321 = vmul.f32 %v663, %v1227
        %v1322 = vmul.f32 %v664, %v1228
        %v1323 = vmul.f32 %v665, %v1229
        %v1324 = vmul.f32 %v666, %v1230
        %v1325 = vmul.f32 %v667, %v1231
        %v1326 = vmul.f32 %v668, %v1232
        %v1327 = vmul.f32 %v669, %v1233
        %v1328 = vmul.f32 %v670, %v1234
        %v1329 = vmul.f32 %v671, %v1235
        %v1330 = vmul.f32 %v672, %v1236
        %v1331 = vmul.f32 %v673, %v1237
        %v1332 = vmul.f32 %v674, %v1238
        %v1333 = vmul.f32 %v675, %v1239
        %v1334 = vmul.f32 %v676, %v1240
        %v1335 = vmul.f32 %v677, %v1241
        %v1336 = vmul.f32 %v678, %v1242
        %v1337 = vmul.f32 %v679, %v1243
        %v1338 = vmul.f32 %v680, %v1244
        %v1339 = vmul.f32 %v681, %v1245
        %v1340 = vmul.f32 %v682, %v1246
        %v1341 = vmul.f32 %v683, %v1247
        %v1342 = vmul.f32 %v684, %v1248
        %v1343 = vmul.f32 %v685, %v1249
        %v1344 = vmul.f32 %v686, %v1250
        %v1345 = vmul.f32 %v687, %v1251
        %v1346 = vmul.f32 %v688, %v1252
        %v1347 = vmul.f32 %v689, %v1253
        %v1348 = vmul.f32 %v690, %v1254
        %v1349 = vmul.f32 %v691, %v1255
        %v1350 = vmul.f32 %v692, %v1256
        %v1351 = vmul.f32 %v693, %v1257
        %v1352 = vmul.f32 %v694, %v1258
        %v1353 = vmul.f32 %v695, %v1259
        %v1354 = vmul.f32 %v696, %v1260
        %v1355 = vmul.f32 %v697, %v1261
        %v1356 = vmul.f32 %v698, %v1262
        %v1357 = vmul.f32 %v699, %v1263
        %v1358 = vmul.f32 %v700, %v1264
        %v1359 = vmul.f32 %v701, %v1265
        %v1360 = vmul.f32 %v702, %v1266
        %v1361 = vmul.f32 %v703, %v1267
        %v1362 = vmul.f32 %v704, %v1268
        %v1363 = vmul.f32 %v705, %v1269
        %v1364 = vmul.f32 %v706, %v1270
        %v1365 = vmul.f32 %v707, %v1271
        %v1366 = vmul.f32 %v708, %v1272
        %v1367 = vld [vmem:[%s227] sm:$0xff]
        %v1368 = vld [vmem:[%s227 + $0x8] sm:$0xff]
        %v1369 = vld [vmem:[%s227 + $0x10] sm:$0xff]
        %v1370 = vld [vmem:[%s227 + $0x18] sm:$0xff]
        %v1371 = vld [vmem:[%s227 + $0x20] sm:$0xff]
        %v1372 = vld [vmem:[%s227 + $0x28] sm:$0xff]
        %v1373 = vld [vmem:[%s227 + $0x30] sm:$0xff]
        %v1374 = vld [vmem:[%s227 + $0x38] sm:$0xff]
        %v1375 = vld [vmem:[%s227 + $0x40] sm:$0xff]
        %v1376 = vld [vmem:[%s227 + $0x48] sm:$0xff]
        %v1377 = vld [vmem:[%s227 + $0x50] sm:$0xff]
        %v1378 = vld [vmem:[%s227 + $0x58] sm:$0xff]
        %v1379 = vld [vmem:[%s227 + $0x60] sm:$0xff]
        %v1380 = vld [vmem:[%s227 + $0x68] sm:$0xff]
        %v1381 = vld [vmem:[%s227 + $0x70] sm:$0xff]
        %v1382 = vld [vmem:[%s227 + $0x78] sm:$0xff]
        %v1383 = vld [vmem:[%s227 + $0x80] sm:$0xff]
        %v1384 = vld [vmem:[%s227 + $0x88] sm:$0xff]
        %v1385 = vld [vmem:[%s227 + $0x90] sm:$0xff]
        %v1386 = vld [vmem:[%s227 + $0x98] sm:$0xff]
        %v1387 = vld [vmem:[%s227 + $0xa0] sm:$0xff]
        %v1388 = vld [vmem:[%s227 + $0xa8] sm:$0xff]
        %v1389 = vld [vmem:[%s227 + $0xb0] sm:$0xff]
        %v1390 = vld [vmem:[%s227 + $0xb8] sm:$0xff]
        %v1391 = vld [vmem:[%s227 + $0xc0] sm:$0xff]
        %v1392 = vld [vmem:[%s227 + $0xc8] sm:$0xff]
        %v1393 = vld [vmem:[%s227 + $0xd0] sm:$0xff]
        %v1394 = vld [vmem:[%s227 + $0xd8] sm:$0xff]
        %v1395 = vld [vmem:[%s227 + $0xe0] sm:$0xff]
        %v1396 = vld [vmem:[%s227 + $0xe8] sm:$0xff]
        %v1397 = vld [vmem:[%s227 + $0xf0] sm:$0xff]
        %v1398 = vld [vmem:[%s227 + $0xf8] sm:$0xff]
        %v1399 = vld [vmem:[%s227 + $0x100] sm:$0xff]
        %v1400 = vld [vmem:[%s227 + $0x108] sm:$0xff]
        %v1401 = vld [vmem:[%s227 + $0x110] sm:$0xff]
        %v1402 = vld [vmem:[%s227 + $0x118] sm:$0xff]
        %v1403 = vld [vmem:[%s227 + $0x120] sm:$0xff]
        %v1404 = vld [vmem:[%s227 + $0x128] sm:$0xff]
        %v1405 = vld [vmem:[%s227 + $0x130] sm:$0xff]
        %v1406 = vld [vmem:[%s227 + $0x138] sm:$0xff]
        %v1407 = vld [vmem:[%s227 + $0x140] sm:$0xff]
        %v1408 = vld [vmem:[%s227 + $0x148] sm:$0xff]
        %v1409 = vld [vmem:[%s227 + $0x150] sm:$0xff]
        %v1410 = vld [vmem:[%s227 + $0x158] sm:$0xff]
        %v1411 = vld [vmem:[%s227 + $0x160] sm:$0xff]
        %v1412 = vld [vmem:[%s227 + $0x168] sm:$0xff]
        %v1413 = vld [vmem:[%s227 + $0x170] sm:$0xff]
        %v1414 = vld [vmem:[%s227 + $0x178] sm:$0xff]
        %v1415 = vld [vmem:[%s227 + $0x180] sm:$0xff]
        %v1416 = vld [vmem:[%s227 + $0x188] sm:$0xff]
        %v1417 = vld [vmem:[%s227 + $0x190] sm:$0xff]
        %v1418 = vld [vmem:[%s227 + $0x198] sm:$0xff]
        %v1419 = vld [vmem:[%s227 + $0x1a0] sm:$0xff]
        %v1420 = vld [vmem:[%s227 + $0x1a8] sm:$0xff]
        %v1421 = vld [vmem:[%s227 + $0x1b0] sm:$0xff]
        %v1422 = vld [vmem:[%s227 + $0x1b8] sm:$0xff]
        %v1423 = vld [vmem:[%s227 + $0x1c0] sm:$0xff]
        %v1424 = vld [vmem:[%s227 + $0x1c8] sm:$0xff]
        %v1425 = vld [vmem:[%s227 + $0x1d0] sm:$0xff]
        %v1426 = vld [vmem:[%s227 + $0x1d8] sm:$0xff]
        %v1427 = vld [vmem:[%s227 + $0x1e0] sm:$0xff]
        %v1428 = vld [vmem:[%s227 + $0x1e8] sm:$0xff]
        %v1429 = vld [vmem:[%s227 + $0x1f0] sm:$0xff]
        %v1430 = vld [vmem:[%s227 + $0x1f8] sm:$0xff]
        %v1431 = vld [vmem:[%s227 + $0x200] sm:$0xff]
        %v1432 = vld [vmem:[%s227 + $0x208] sm:$0xff]
        %v1433 = vld [vmem:[%s227 + $0x210] sm:$0xff]
        %v1434 = vld [vmem:[%s227 + $0x218] sm:$0xff]
        %v1435 = vld [vmem:[%s227 + $0x220] sm:$0xff]
        %v1436 = vld [vmem:[%s227 + $0x228] sm:$0xff]
        %v1437 = vld [vmem:[%s227 + $0x230] sm:$0xff]
        %v1438 = vld [vmem:[%s227 + $0x238] sm:$0xff]
        %v1439 = vld [vmem:[%s227 + $0x240] sm:$0xff]
        %v1440 = vld [vmem:[%s227 + $0x248] sm:$0xff]
        %v1441 = vld [vmem:[%s227 + $0x250] sm:$0xff]
        %v1442 = vld [vmem:[%s227 + $0x258] sm:$0xff]
        %v1443 = vld [vmem:[%s227 + $0x260] sm:$0xff]
        %v1444 = vld [vmem:[%s227 + $0x268] sm:$0xff]
        %v1445 = vld [vmem:[%s227 + $0x270] sm:$0xff]
        %v1446 = vld [vmem:[%s227 + $0x278] sm:$0xff]
        %v1447 = vld [vmem:[%s227 + $0x280] sm:$0xff]
        %v1448 = vld [vmem:[%s227 + $0x288] sm:$0xff]
        %v1449 = vld [vmem:[%s227 + $0x290] sm:$0xff]
        %v1450 = vld [vmem:[%s227 + $0x298] sm:$0xff]
        %v1451 = vld [vmem:[%s227 + $0x2a0] sm:$0xff]
        %v1452 = vld [vmem:[%s227 + $0x2a8] sm:$0xff]
        %v1453 = vld [vmem:[%s227 + $0x2b0] sm:$0xff]
        %v1454 = vld [vmem:[%s227 + $0x2b8] sm:$0xff]
        %v1455 = vld [vmem:[%s227 + $0x2c0] sm:$0xff]
        %v1456 = vld [vmem:[%s227 + $0x2c8] sm:$0xff]
        %v1457 = vld [vmem:[%s227 + $0x2d0] sm:$0xff]
        %v1458 = vld [vmem:[%s227 + $0x2d8] sm:$0xff]
        %v1459 = vld [vmem:[%s227 + $0x2e0] sm:$0xff]
        %v1460 = vld [vmem:[%s227 + $0x2e8] sm:$0xff]
        %v1461 = vlaneseq
        %v1462 = vand.u32 %v1461, 127
        %1463 = vset.pattern.permute.xlu0 0
        %1464 = vperm.xlu0 %1463, %v1367
        %v1465 = vpop.permute.xlu0 %1464
        %1466 = vset.pattern.permute.xlu0 0
        %1467 = vperm.xlu0 %1466, %v1368
        %v1468 = vpop.permute.xlu0 %1467
        %1469 = vset.pattern.permute.xlu0 0
        %1470 = vperm.xlu0 %1469, %v1369
        %v1471 = vpop.permute.xlu0 %1470
        %1472 = vset.pattern.permute.xlu0 0
        %1473 = vperm.xlu0 %1472, %v1370
        %v1474 = vpop.permute.xlu0 %1473
        %1475 = vset.pattern.permute.xlu0 0
        %1476 = vperm.xlu0 %1475, %v1371
        %v1477 = vpop.permute.xlu0 %1476
        %1478 = vset.pattern.permute.xlu0 0
        %1479 = vperm.xlu0 %1478, %v1372
        %v1480 = vpop.permute.xlu0 %1479
        %1481 = vset.pattern.permute.xlu0 0
        %1482 = vperm.xlu0 %1481, %v1373
        %v1483 = vpop.permute.xlu0 %1482
        %1484 = vset.pattern.permute.xlu0 0
        %1485 = vperm.xlu0 %1484, %v1374
        %v1486 = vpop.permute.xlu0 %1485
        %1487 = vset.pattern.permute.xlu0 0
        %1488 = vperm.xlu0 %1487, %v1375
        %v1489 = vpop.permute.xlu0 %1488
        %1490 = vset.pattern.permute.xlu0 0
        %1491 = vperm.xlu0 %1490, %v1376
        %v1492 = vpop.permute.xlu0 %1491
        %1493 = vset.pattern.permute.xlu0 0
        %1494 = vperm.xlu0 %1493, %v1377
        %v1495 = vpop.permute.xlu0 %1494
        %1496 = vset.pattern.permute.xlu0 0
        %1497 = vperm.xlu0 %1496, %v1378
        %v1498 = vpop.permute.xlu0 %1497
        %1499 = vset.pattern.permute.xlu0 0
        %1500 = vperm.xlu0 %1499, %v1379
        %v1501 = vpop.permute.xlu0 %1500
        %1502 = vset.pattern.permute.xlu0 0
        %1503 = vperm.xlu0 %1502, %v1380
        %v1504 = vpop.permute.xlu0 %1503
        %1505 = vset.pattern.permute.xlu0 0
        %1506 = vperm.xlu0 %1505, %v1381
        %v1507 = vpop.permute.xlu0 %1506
        %1508 = vset.pattern.permute.xlu0 0
        %1509 = vperm.xlu0 %1508, %v1382
        %v1510 = vpop.permute.xlu0 %1509
        %1511 = vset.pattern.permute.xlu0 0
        %1512 = vperm.xlu0 %1511, %v1383
        %v1513 = vpop.permute.xlu0 %1512
        %1514 = vset.pattern.permute.xlu0 0
        %1515 = vperm.xlu0 %1514, %v1384
        %v1516 = vpop.permute.xlu0 %1515
        %1517 = vset.pattern.permute.xlu0 0
        %1518 = vperm.xlu0 %1517, %v1385
        %v1519 = vpop.permute.xlu0 %1518
        %1520 = vset.pattern.permute.xlu0 0
        %1521 = vperm.xlu0 %1520, %v1386
        %v1522 = vpop.permute.xlu0 %1521
        %1523 = vset.pattern.permute.xlu0 0
        %1524 = vperm.xlu0 %1523, %v1387
        %v1525 = vpop.permute.xlu0 %1524
        %1526 = vset.pattern.permute.xlu0 0
        %1527 = vperm.xlu0 %1526, %v1388
        %v1528 = vpop.permute.xlu0 %1527
        %1529 = vset.pattern.permute.xlu0 0
        %1530 = vperm.xlu0 %1529, %v1389
        %v1531 = vpop.permute.xlu0 %1530
        %1532 = vset.pattern.permute.xlu0 0
        %1533 = vperm.xlu0 %1532, %v1390
        %v1534 = vpop.permute.xlu0 %1533
        %1535 = vset.pattern.permute.xlu0 0
        %1536 = vperm.xlu0 %1535, %v1391
        %v1537 = vpop.permute.xlu0 %1536
        %1538 = vset.pattern.permute.xlu0 0
        %1539 = vperm.xlu0 %1538, %v1392
        %v1540 = vpop.permute.xlu0 %1539
        %1541 = vset.pattern.permute.xlu0 0
        %1542 = vperm.xlu0 %1541, %v1393
        %v1543 = vpop.permute.xlu0 %1542
        %1544 = vset.pattern.permute.xlu0 0
        %1545 = vperm.xlu0 %1544, %v1394
        %v1546 = vpop.permute.xlu0 %1545
        %1547 = vset.pattern.permute.xlu0 0
        %1548 = vperm.xlu0 %1547, %v1395
        %v1549 = vpop.permute.xlu0 %1548
        %1550 = vset.pattern.permute.xlu0 0
        %1551 = vperm.xlu0 %1550, %v1396
        %v1552 = vpop.permute.xlu0 %1551
        %1553 = vset.pattern.permute.xlu0 0
        %1554 = vperm.xlu0 %1553, %v1397
        %v1555 = vpop.permute.xlu0 %1554
        %1556 = vset.pattern.permute.xlu0 0
        %1557 = vperm.xlu0 %1556, %v1398
        %v1558 = vpop.permute.xlu0 %1557
        %1559 = vset.pattern.permute.xlu0 0
        %1560 = vperm.xlu0 %1559, %v1399
        %v1561 = vpop.permute.xlu0 %1560
        %1562 = vset.pattern.permute.xlu0 0
        %1563 = vperm.xlu0 %1562, %v1400
        %v1564 = vpop.permute.xlu0 %1563
        %1565 = vset.pattern.permute.xlu0 0
        %1566 = vperm.xlu0 %1565, %v1401
        %v1567 = vpop.permute.xlu0 %1566
        %1568 = vset.pattern.permute.xlu0 0
        %1569 = vperm.xlu0 %1568, %v1402
        %v1570 = vpop.permute.xlu0 %1569
        %1571 = vset.pattern.permute.xlu0 0
        %1572 = vperm.xlu0 %1571, %v1403
        %v1573 = vpop.permute.xlu0 %1572
        %1574 = vset.pattern.permute.xlu0 0
        %1575 = vperm.xlu0 %1574, %v1404
        %v1576 = vpop.permute.xlu0 %1575
        %1577 = vset.pattern.permute.xlu0 0
        %1578 = vperm.xlu0 %1577, %v1405
        %v1579 = vpop.permute.xlu0 %1578
        %1580 = vset.pattern.permute.xlu0 0
        %1581 = vperm.xlu0 %1580, %v1406
        %v1582 = vpop.permute.xlu0 %1581
        %1583 = vset.pattern.permute.xlu0 0
        %1584 = vperm.xlu0 %1583, %v1407
        %v1585 = vpop.permute.xlu0 %1584
        %1586 = vset.pattern.permute.xlu0 0
        %1587 = vperm.xlu0 %1586, %v1408
        %v1588 = vpop.permute.xlu0 %1587
        %1589 = vset.pattern.permute.xlu0 0
        %1590 = vperm.xlu0 %1589, %v1409
        %v1591 = vpop.permute.xlu0 %1590
        %1592 = vset.pattern.permute.xlu0 0
        %1593 = vperm.xlu0 %1592, %v1410
        %v1594 = vpop.permute.xlu0 %1593
        %1595 = vset.pattern.permute.xlu0 0
        %1596 = vperm.xlu0 %1595, %v1411
        %v1597 = vpop.permute.xlu0 %1596
        %1598 = vset.pattern.permute.xlu0 0
        %1599 = vperm.xlu0 %1598, %v1412
        %v1600 = vpop.permute.xlu0 %1599
        %1601 = vset.pattern.permute.xlu0 0
        %1602 = vperm.xlu0 %1601, %v1413
        %v1603 = vpop.permute.xlu0 %1602
        %1604 = vset.pattern.permute.xlu0 0
        %1605 = vperm.xlu0 %1604, %v1414
        %v1606 = vpop.permute.xlu0 %1605
        %1607 = vset.pattern.permute.xlu0 0
        %1608 = vperm.xlu0 %1607, %v1415
        %v1609 = vpop.permute.xlu0 %1608
        %1610 = vset.pattern.permute.xlu0 0
        %1611 = vperm.xlu0 %1610, %v1416
        %v1612 = vpop.permute.xlu0 %1611
        %1613 = vset.pattern.permute.xlu0 0
        %1614 = vperm.xlu0 %1613, %v1417
        %v1615 = vpop.permute.xlu0 %1614
        %1616 = vset.pattern.permute.xlu0 0
        %1617 = vperm.xlu0 %1616, %v1418
        %v1618 = vpop.permute.xlu0 %1617
        %1619 = vset.pattern.permute.xlu0 0
        %1620 = vperm.xlu0 %1619, %v1419
        %v1621 = vpop.permute.xlu0 %1620
        %1622 = vset.pattern.permute.xlu0 0
        %1623 = vperm.xlu0 %1622, %v1420
        %v1624 = vpop.permute.xlu0 %1623
        %1625 = vset.pattern.permute.xlu0 0
        %1626 = vperm.xlu0 %1625, %v1421
        %v1627 = vpop.permute.xlu0 %1626
        %1628 = vset.pattern.permute.xlu0 0
        %1629 = vperm.xlu0 %1628, %v1422
        %v1630 = vpop.permute.xlu0 %1629
        %1631 = vset.pattern.permute.xlu0 0
        %1632 = vperm.xlu0 %1631, %v1423
        %v1633 = vpop.permute.xlu0 %1632
        %1634 = vset.pattern.permute.xlu0 0
        %1635 = vperm.xlu0 %1634, %v1424
        %v1636 = vpop.permute.xlu0 %1635
        %1637 = vset.pattern.permute.xlu0 0
        %1638 = vperm.xlu0 %1637, %v1425
        %v1639 = vpop.permute.xlu0 %1638
        %1640 = vset.pattern.permute.xlu0 0
        %1641 = vperm.xlu0 %1640, %v1426
        %v1642 = vpop.permute.xlu0 %1641
        %1643 = vset.pattern.permute.xlu0 0
        %1644 = vperm.xlu0 %1643, %v1427
        %v1645 = vpop.permute.xlu0 %1644
        %1646 = vset.pattern.permute.xlu0 0
        %1647 = vperm.xlu0 %1646, %v1428
        %v1648 = vpop.permute.xlu0 %1647
        %1649 = vset.pattern.permute.xlu0 0
        %1650 = vperm.xlu0 %1649, %v1429
        %v1651 = vpop.permute.xlu0 %1650
        %1652 = vset.pattern.permute.xlu0 0
        %1653 = vperm.xlu0 %1652, %v1430
        %v1654 = vpop.permute.xlu0 %1653
        %1655 = vset.pattern.permute.xlu0 0
        %1656 = vperm.xlu0 %1655, %v1431
        %v1657 = vpop.permute.xlu0 %1656
        %1658 = vset.pattern.permute.xlu0 0
        %1659 = vperm.xlu0 %1658, %v1432
        %v1660 = vpop.permute.xlu0 %1659
        %1661 = vset.pattern.permute.xlu0 0
        %1662 = vperm.xlu0 %1661, %v1433
        %v1663 = vpop.permute.xlu0 %1662
        %1664 = vset.pattern.permute.xlu0 0
        %1665 = vperm.xlu0 %1664, %v1434
        %v1666 = vpop.permute.xlu0 %1665
        %1667 = vset.pattern.permute.xlu0 0
        %1668 = vperm.xlu0 %1667, %v1435
        %v1669 = vpop.permute.xlu0 %1668
        %1670 = vset.pattern.permute.xlu0 0
        %1671 = vperm.xlu0 %1670, %v1436
        %v1672 = vpop.permute.xlu0 %1671
        %1673 = vset.pattern.permute.xlu0 0
        %1674 = vperm.xlu0 %1673, %v1437
        %v1675 = vpop.permute.xlu0 %1674
        %1676 = vset.pattern.permute.xlu0 0
        %1677 = vperm.xlu0 %1676, %v1438
        %v1678 = vpop.permute.xlu0 %1677
        %1679 = vset.pattern.permute.xlu0 0
        %1680 = vperm.xlu0 %1679, %v1439
        %v1681 = vpop.permute.xlu0 %1680
        %1682 = vset.pattern.permute.xlu0 0
        %1683 = vperm.xlu0 %1682, %v1440
        %v1684 = vpop.permute.xlu0 %1683
        %1685 = vset.pattern.permute.xlu0 0
        %1686 = vperm.xlu0 %1685, %v1441
        %v1687 = vpop.permute.xlu0 %1686
        %1688 = vset.pattern.permute.xlu0 0
        %1689 = vperm.xlu0 %1688, %v1442
        %v1690 = vpop.permute.xlu0 %1689
        %1691 = vset.pattern.permute.xlu0 0
        %1692 = vperm.xlu0 %1691, %v1443
        %v1693 = vpop.permute.xlu0 %1692
        %1694 = vset.pattern.permute.xlu0 0
        %1695 = vperm.xlu0 %1694, %v1444
        %v1696 = vpop.permute.xlu0 %1695
        %1697 = vset.pattern.permute.xlu0 0
        %1698 = vperm.xlu0 %1697, %v1445
        %v1699 = vpop.permute.xlu0 %1698
        %1700 = vset.pattern.permute.xlu0 0
        %1701 = vperm.xlu0 %1700, %v1446
        %v1702 = vpop.permute.xlu0 %1701
        %1703 = vset.pattern.permute.xlu0 0
        %1704 = vperm.xlu0 %1703, %v1447
        %v1705 = vpop.permute.xlu0 %1704
        %1706 = vset.pattern.permute.xlu0 0
        %1707 = vperm.xlu0 %1706, %v1448
        %v1708 = vpop.permute.xlu0 %1707
        %1709 = vset.pattern.permute.xlu0 0
        %1710 = vperm.xlu0 %1709, %v1449
        %v1711 = vpop.permute.xlu0 %1710
        %1712 = vset.pattern.permute.xlu0 0
        %1713 = vperm.xlu0 %1712, %v1450
        %v1714 = vpop.permute.xlu0 %1713
        %1715 = vset.pattern.permute.xlu0 0
        %1716 = vperm.xlu0 %1715, %v1451
        %v1717 = vpop.permute.xlu0 %1716
        %1718 = vset.pattern.permute.xlu0 0
        %1719 = vperm.xlu0 %1718, %v1452
        %v1720 = vpop.permute.xlu0 %1719
        %1721 = vset.pattern.permute.xlu0 0
        %1722 = vperm.xlu0 %1721, %v1453
        %v1723 = vpop.permute.xlu0 %1722
        %1724 = vset.pattern.permute.xlu0 0
        %1725 = vperm.xlu0 %1724, %v1454
        %v1726 = vpop.permute.xlu0 %1725
        %1727 = vset.pattern.permute.xlu0 0
        %1728 = vperm.xlu0 %1727, %v1455
        %v1729 = vpop.permute.xlu0 %1728
        %1730 = vset.pattern.permute.xlu0 0
        %1731 = vperm.xlu0 %1730, %v1456
        %v1732 = vpop.permute.xlu0 %1731
        %1733 = vset.pattern.permute.xlu0 0
        %1734 = vperm.xlu0 %1733, %v1457
        %v1735 = vpop.permute.xlu0 %1734
        %1736 = vset.pattern.permute.xlu0 0
        %1737 = vperm.xlu0 %1736, %v1458
        %v1738 = vpop.permute.xlu0 %1737
        %1739 = vset.pattern.permute.xlu0 0
        %1740 = vperm.xlu0 %1739, %v1459
        %v1741 = vpop.permute.xlu0 %1740
        %1742 = vset.pattern.permute.xlu0 0
        %1743 = vperm.xlu0 %1742, %v1460
        %v1744 = vpop.permute.xlu0 %1743
        %vm1745 = vcmp.eq.s32.totalorder %v1465, %v1462
        %vm1746 = vcmp.eq.s32.totalorder %v1468, %v1462
        %vm1747 = vcmp.eq.s32.totalorder %v1471, %v1462
        %vm1748 = vcmp.eq.s32.totalorder %v1474, %v1462
        %vm1749 = vcmp.eq.s32.totalorder %v1477, %v1462
        %vm1750 = vcmp.eq.s32.totalorder %v1480, %v1462
        %vm1751 = vcmp.eq.s32.totalorder %v1483, %v1462
        %vm1752 = vcmp.eq.s32.totalorder %v1486, %v1462
        %vm1753 = vcmp.eq.s32.totalorder %v1489, %v1462
        %vm1754 = vcmp.eq.s32.totalorder %v1492, %v1462
        %vm1755 = vcmp.eq.s32.totalorder %v1495, %v1462
        %vm1756 = vcmp.eq.s32.totalorder %v1498, %v1462
        %vm1757 = vcmp.eq.s32.totalorder %v1501, %v1462
        %vm1758 = vcmp.eq.s32.totalorder %v1504, %v1462
        %vm1759 = vcmp.eq.s32.totalorder %v1507, %v1462
        %vm1760 = vcmp.eq.s32.totalorder %v1510, %v1462
        %vm1761 = vcmp.eq.s32.totalorder %v1513, %v1462
        %vm1762 = vcmp.eq.s32.totalorder %v1516, %v1462
        %vm1763 = vcmp.eq.s32.totalorder %v1519, %v1462
        %vm1764 = vcmp.eq.s32.totalorder %v1522, %v1462
        %vm1765 = vcmp.eq.s32.totalorder %v1525, %v1462
        %vm1766 = vcmp.eq.s32.totalorder %v1528, %v1462
        %vm1767 = vcmp.eq.s32.totalorder %v1531, %v1462
        %vm1768 = vcmp.eq.s32.totalorder %v1534, %v1462
        %vm1769 = vcmp.eq.s32.totalorder %v1537, %v1462
        %vm1770 = vcmp.eq.s32.totalorder %v1540, %v1462
        %vm1771 = vcmp.eq.s32.totalorder %v1543, %v1462
        %vm1772 = vcmp.eq.s32.totalorder %v1546, %v1462
        %vm1773 = vcmp.eq.s32.totalorder %v1549, %v1462
        %vm1774 = vcmp.eq.s32.totalorder %v1552, %v1462
        %vm1775 = vcmp.eq.s32.totalorder %v1555, %v1462
        %vm1776 = vcmp.eq.s32.totalorder %v1558, %v1462
        %vm1777 = vcmp.eq.s32.totalorder %v1561, %v1462
        %vm1778 = vcmp.eq.s32.totalorder %v1564, %v1462
        %vm1779 = vcmp.eq.s32.totalorder %v1567, %v1462
        %vm1780 = vcmp.eq.s32.totalorder %v1570, %v1462
        %vm1781 = vcmp.eq.s32.totalorder %v1573, %v1462
        %vm1782 = vcmp.eq.s32.totalorder %v1576, %v1462
        %vm1783 = vcmp.eq.s32.totalorder %v1579, %v1462
        %vm1784 = vcmp.eq.s32.totalorder %v1582, %v1462
        %vm1785 = vcmp.eq.s32.totalorder %v1585, %v1462
        %vm1786 = vcmp.eq.s32.totalorder %v1588, %v1462
        %vm1787 = vcmp.eq.s32.totalorder %v1591, %v1462
        %vm1788 = vcmp.eq.s32.totalorder %v1594, %v1462
        %vm1789 = vcmp.eq.s32.totalorder %v1597, %v1462
        %vm1790 = vcmp.eq.s32.totalorder %v1600, %v1462
        %vm1791 = vcmp.eq.s32.totalorder %v1603, %v1462
        %vm1792 = vcmp.eq.s32.totalorder %v1606, %v1462
        %vm1793 = vcmp.eq.s32.totalorder %v1609, %v1462
        %vm1794 = vcmp.eq.s32.totalorder %v1612, %v1462
        %vm1795 = vcmp.eq.s32.totalorder %v1615, %v1462
        %vm1796 = vcmp.eq.s32.totalorder %v1618, %v1462
        %vm1797 = vcmp.eq.s32.totalorder %v1621, %v1462
        %vm1798 = vcmp.eq.s32.totalorder %v1624, %v1462
        %vm1799 = vcmp.eq.s32.totalorder %v1627, %v1462
        %vm1800 = vcmp.eq.s32.totalorder %v1630, %v1462
        %vm1801 = vcmp.eq.s32.totalorder %v1633, %v1462
        %vm1802 = vcmp.eq.s32.totalorder %v1636, %v1462
        %vm1803 = vcmp.eq.s32.totalorder %v1639, %v1462
        %vm1804 = vcmp.eq.s32.totalorder %v1642, %v1462
        %vm1805 = vcmp.eq.s32.totalorder %v1645, %v1462
        %vm1806 = vcmp.eq.s32.totalorder %v1648, %v1462
        %vm1807 = vcmp.eq.s32.totalorder %v1651, %v1462
        %vm1808 = vcmp.eq.s32.totalorder %v1654, %v1462
        %vm1809 = vcmp.eq.s32.totalorder %v1657, %v1462
        %vm1810 = vcmp.eq.s32.totalorder %v1660, %v1462
        %vm1811 = vcmp.eq.s32.totalorder %v1663, %v1462
        %vm1812 = vcmp.eq.s32.totalorder %v1666, %v1462
        %vm1813 = vcmp.eq.s32.totalorder %v1669, %v1462
        %vm1814 = vcmp.eq.s32.totalorder %v1672, %v1462
        %vm1815 = vcmp.eq.s32.totalorder %v1675, %v1462
        %vm1816 = vcmp.eq.s32.totalorder %v1678, %v1462
        %vm1817 = vcmp.eq.s32.totalorder %v1681, %v1462
        %vm1818 = vcmp.eq.s32.totalorder %v1684, %v1462
        %vm1819 = vcmp.eq.s32.totalorder %v1687, %v1462
        %vm1820 = vcmp.eq.s32.totalorder %v1690, %v1462
        %vm1821 = vcmp.eq.s32.totalorder %v1693, %v1462
        %vm1822 = vcmp.eq.s32.totalorder %v1696, %v1462
        %vm1823 = vcmp.eq.s32.totalorder %v1699, %v1462
        %vm1824 = vcmp.eq.s32.totalorder %v1702, %v1462
        %vm1825 = vcmp.eq.s32.totalorder %v1705, %v1462
        %vm1826 = vcmp.eq.s32.totalorder %v1708, %v1462
        %vm1827 = vcmp.eq.s32.totalorder %v1711, %v1462
        %vm1828 = vcmp.eq.s32.totalorder %v1714, %v1462
        %vm1829 = vcmp.eq.s32.totalorder %v1717, %v1462
        %vm1830 = vcmp.eq.s32.totalorder %v1720, %v1462
        %vm1831 = vcmp.eq.s32.totalorder %v1723, %v1462
        %vm1832 = vcmp.eq.s32.totalorder %v1726, %v1462
        %vm1833 = vcmp.eq.s32.totalorder %v1729, %v1462
        %vm1834 = vcmp.eq.s32.totalorder %v1732, %v1462
        %vm1835 = vcmp.eq.s32.totalorder %v1735, %v1462
        %vm1836 = vcmp.eq.s32.totalorder %v1738, %v1462
        %vm1837 = vcmp.eq.s32.totalorder %v1741, %v1462
        %vm1838 = vcmp.eq.s32.totalorder %v1744, %v1462
        %v1839 = vsel %vm1745, 1, 0
        %v1840 = vsel %vm1746, 1, 0
        %v1841 = vsel %vm1747, 1, 0
        %v1842 = vsel %vm1748, 1, 0
        %v1843 = vsel %vm1749, 1, 0
        %v1844 = vsel %vm1750, 1, 0
        %v1845 = vsel %vm1751, 1, 0
        %v1846 = vsel %vm1752, 1, 0
        %v1847 = vsel %vm1753, 1, 0
        %v1848 = vsel %vm1754, 1, 0
        %v1849 = vsel %vm1755, 1, 0
        %v1850 = vsel %vm1756, 1, 0
        %v1851 = vsel %vm1757, 1, 0
        %v1852 = vsel %vm1758, 1, 0
        %v1853 = vsel %vm1759, 1, 0
        %v1854 = vsel %vm1760, 1, 0
        %v1855 = vsel %vm1761, 1, 0
        %v1856 = vsel %vm1762, 1, 0
        %v1857 = vsel %vm1763, 1, 0
        %v1858 = vsel %vm1764, 1, 0
        %v1859 = vsel %vm1765, 1, 0
        %v1860 = vsel %vm1766, 1, 0
        %v1861 = vsel %vm1767, 1, 0
        %v1862 = vsel %vm1768, 1, 0
        %v1863 = vsel %vm1769, 1, 0
        %v1864 = vsel %vm1770, 1, 0
        %v1865 = vsel %vm1771, 1, 0
        %v1866 = vsel %vm1772, 1, 0
        %v1867 = vsel %vm1773, 1, 0
        %v1868 = vsel %vm1774, 1, 0
        %v1869 = vsel %vm1775, 1, 0
        %v1870 = vsel %vm1776, 1, 0
        %v1871 = vsel %vm1777, 1, 0
        %v1872 = vsel %vm1778, 1, 0
        %v1873 = vsel %vm1779, 1, 0
        %v1874 = vsel %vm1780, 1, 0
        %v1875 = vsel %vm1781, 1, 0
        %v1876 = vsel %vm1782, 1, 0
        %v1877 = vsel %vm1783, 1, 0
        %v1878 = vsel %vm1784, 1, 0
        %v1879 = vsel %vm1785, 1, 0
        %v1880 = vsel %vm1786, 1, 0
        %v1881 = vsel %vm1787, 1, 0
        %v1882 = vsel %vm1788, 1, 0
        %v1883 = vsel %vm1789, 1, 0
        %v1884 = vsel %vm1790, 1, 0
        %v1885 = vsel %vm1791, 1, 0
        %v1886 = vsel %vm1792, 1, 0
        %v1887 = vsel %vm1793, 1, 0
        %v1888 = vsel %vm1794, 1, 0
        %v1889 = vsel %vm1795, 1, 0
        %v1890 = vsel %vm1796, 1, 0
        %v1891 = vsel %vm1797, 1, 0
        %v1892 = vsel %vm1798, 1, 0
        %v1893 = vsel %vm1799, 1, 0
        %v1894 = vsel %vm1800, 1, 0
        %v1895 = vsel %vm1801, 1, 0
        %v1896 = vsel %vm1802, 1, 0
        %v1897 = vsel %vm1803, 1, 0
        %v1898 = vsel %vm1804, 1, 0
        %v1899 = vsel %vm1805, 1, 0
        %v1900 = vsel %vm1806, 1, 0
        %v1901 = vsel %vm1807, 1, 0
        %v1902 = vsel %vm1808, 1, 0
        %v1903 = vsel %vm1809, 1, 0
        %v1904 = vsel %vm1810, 1, 0
        %v1905 = vsel %vm1811, 1, 0
        %v1906 = vsel %vm1812, 1, 0
        %v1907 = vsel %vm1813, 1, 0
        %v1908 = vsel %vm1814, 1, 0
        %v1909 = vsel %vm1815, 1, 0
        %v1910 = vsel %vm1816, 1, 0
        %v1911 = vsel %vm1817, 1, 0
        %v1912 = vsel %vm1818, 1, 0
        %v1913 = vsel %vm1819, 1, 0
        %v1914 = vsel %vm1820, 1, 0
        %v1915 = vsel %vm1821, 1, 0
        %v1916 = vsel %vm1822, 1, 0
        %v1917 = vsel %vm1823, 1, 0
        %v1918 = vsel %vm1824, 1, 0
        %v1919 = vsel %vm1825, 1, 0
        %v1920 = vsel %vm1826, 1, 0
        %v1921 = vsel %vm1827, 1, 0
        %v1922 = vsel %vm1828, 1, 0
        %v1923 = vsel %vm1829, 1, 0
        %v1924 = vsel %vm1830, 1, 0
        %v1925 = vsel %vm1831, 1, 0
        %v1926 = vsel %vm1832, 1, 0
        %v1927 = vsel %vm1833, 1, 0
        %v1928 = vsel %vm1834, 1, 0
        %v1929 = vsel %vm1835, 1, 0
        %v1930 = vsel %vm1836, 1, 0
        %v1931 = vsel %vm1837, 1, 0
        %v1932 = vsel %vm1838, 1, 0
        %v1933 = vcvt.s32.f32 %v1839
        %v1934 = vcvt.s32.f32 %v1840
        %v1935 = vcvt.s32.f32 %v1841
        %v1936 = vcvt.s32.f32 %v1842
        %v1937 = vcvt.s32.f32 %v1843
        %v1938 = vcvt.s32.f32 %v1844
        %v1939 = vcvt.s32.f32 %v1845
        %v1940 = vcvt.s32.f32 %v1846
        %v1941 = vcvt.s32.f32 %v1847
        %v1942 = vcvt.s32.f32 %v1848
        %v1943 = vcvt.s32.f32 %v1849
        %v1944 = vcvt.s32.f32 %v1850
        %v1945 = vcvt.s32.f32 %v1851
        %v1946 = vcvt.s32.f32 %v1852
        %v1947 = vcvt.s32.f32 %v1853
        %v1948 = vcvt.s32.f32 %v1854
        %v1949 = vcvt.s32.f32 %v1855
        %v1950 = vcvt.s32.f32 %v1856
        %v1951 = vcvt.s32.f32 %v1857
        %v1952 = vcvt.s32.f32 %v1858
        %v1953 = vcvt.s32.f32 %v1859
        %v1954 = vcvt.s32.f32 %v1860
        %v1955 = vcvt.s32.f32 %v1861
        %v1956 = vcvt.s32.f32 %v1862
        %v1957 = vcvt.s32.f32 %v1863
        %v1958 = vcvt.s32.f32 %v1864
        %v1959 = vcvt.s32.f32 %v1865
        %v1960 = vcvt.s32.f32 %v1866
        %v1961 = vcvt.s32.f32 %v1867
        %v1962 = vcvt.s32.f32 %v1868
        %v1963 = vcvt.s32.f32 %v1869
        %v1964 = vcvt.s32.f32 %v1870
        %v1965 = vcvt.s32.f32 %v1871
        %v1966 = vcvt.s32.f32 %v1872
        %v1967 = vcvt.s32.f32 %v1873
        %v1968 = vcvt.s32.f32 %v1874
        %v1969 = vcvt.s32.f32 %v1875
        %v1970 = vcvt.s32.f32 %v1876
        %v1971 = vcvt.s32.f32 %v1877
        %v1972 = vcvt.s32.f32 %v1878
        %v1973 = vcvt.s32.f32 %v1879
        %v1974 = vcvt.s32.f32 %v1880
        %v1975 = vcvt.s32.f32 %v1881
        %v1976 = vcvt.s32.f32 %v1882
        %v1977 = vcvt.s32.f32 %v1883
        %v1978 = vcvt.s32.f32 %v1884
        %v1979 = vcvt.s32.f32 %v1885
        %v1980 = vcvt.s32.f32 %v1886
        %v1981 = vcvt.s32.f32 %v1887
        %v1982 = vcvt.s32.f32 %v1888
        %v1983 = vcvt.s32.f32 %v1889
        %v1984 = vcvt.s32.f32 %v1890
        %v1985 = vcvt.s32.f32 %v1891
        %v1986 = vcvt.s32.f32 %v1892
        %v1987 = vcvt.s32.f32 %v1893
        %v1988 = vcvt.s32.f32 %v1894
        %v1989 = vcvt.s32.f32 %v1895
        %v1990 = vcvt.s32.f32 %v1896
        %v1991 = vcvt.s32.f32 %v1897
        %v1992 = vcvt.s32.f32 %v1898
        %v1993 = vcvt.s32.f32 %v1899
        %v1994 = vcvt.s32.f32 %v1900
        %v1995 = vcvt.s32.f32 %v1901
        %v1996 = vcvt.s32.f32 %v1902
        %v1997 = vcvt.s32.f32 %v1903
        %v1998 = vcvt.s32.f32 %v1904
        %v1999 = vcvt.s32.f32 %v1905
        %v2000 = vcvt.s32.f32 %v1906
        %v2001 = vcvt.s32.f32 %v1907
        %v2002 = vcvt.s32.f32 %v1908
        %v2003 = vcvt.s32.f32 %v1909
        %v2004 = vcvt.s32.f32 %v1910
        %v2005 = vcvt.s32.f32 %v1911
        %v2006 = vcvt.s32.f32 %v1912
        %v2007 = vcvt.s32.f32 %v1913
        %v2008 = vcvt.s32.f32 %v1914
        %v2009 = vcvt.s32.f32 %v1915
        %v2010 = vcvt.s32.f32 %v1916
        %v2011 = vcvt.s32.f32 %v1917
        %v2012 = vcvt.s32.f32 %v1918
        %v2013 = vcvt.s32.f32 %v1919
        %v2014 = vcvt.s32.f32 %v1920
        %v2015 = vcvt.s32.f32 %v1921
        %v2016 = vcvt.s32.f32 %v1922
        %v2017 = vcvt.s32.f32 %v1923
        %v2018 = vcvt.s32.f32 %v1924
        %v2019 = vcvt.s32.f32 %v1925
        %v2020 = vcvt.s32.f32 %v1926
        %v2021 = vcvt.s32.f32 %v1927
        %v2022 = vcvt.s32.f32 %v1928
        %v2023 = vcvt.s32.f32 %v1929
        %v2024 = vcvt.s32.f32 %v1930
        %v2025 = vcvt.s32.f32 %v1931
        %v2026 = vcvt.s32.f32 %v1932
        %v2027 = vpack.c.bf16 %v1934, %v1933
        %v2028 = vpack.c.bf16 %v1936, %v1935
        %v2029 = vpack.c.bf16 %v1938, %v1937
        %v2030 = vpack.c.bf16 %v1940, %v1939
        %v2031 = vpack.c.bf16 %v1942, %v1941
        %v2032 = vpack.c.bf16 %v1944, %v1943
        %v2033 = vpack.c.bf16 %v1946, %v1945
        %v2034 = vpack.c.bf16 %v1948, %v1947
        %v2035 = vpack.c.bf16 %v1950, %v1949
        %v2036 = vpack.c.bf16 %v1952, %v1951
        %v2037 = vpack.c.bf16 %v1954, %v1953
        %v2038 = vpack.c.bf16 %v1956, %v1955
        %v2039 = vpack.c.bf16 %v1958, %v1957
        %v2040 = vpack.c.bf16 %v1960, %v1959
        %v2041 = vpack.c.bf16 %v1962, %v1961
        %v2042 = vpack.c.bf16 %v1964, %v1963
        %v2043 = vpack.c.bf16 %v1966, %v1965
        %v2044 = vpack.c.bf16 %v1968, %v1967
        %v2045 = vpack.c.bf16 %v1970, %v1969
        %v2046 = vpack.c.bf16 %v1972, %v1971
        %v2047 = vpack.c.bf16 %v1974, %v1973
        %v2048 = vpack.c.bf16 %v1976, %v1975
        %v2049 = vpack.c.bf16 %v1978, %v1977
        %v2050 = vpack.c.bf16 %v1980, %v1979
        %v2051 = vpack.c.bf16 %v1982, %v1981
        %v2052 = vpack.c.bf16 %v1984, %v1983
        %v2053 = vpack.c.bf16 %v1986, %v1985
        %v2054 = vpack.c.bf16 %v1988, %v1987
        %v2055 = vpack.c.bf16 %v1990, %v1989
        %v2056 = vpack.c.bf16 %v1992, %v1991
        %v2057 = vpack.c.bf16 %v1994, %v1993
        %v2058 = vpack.c.bf16 %v1996, %v1995
        %v2059 = vpack.c.bf16 %v1998, %v1997
        %v2060 = vpack.c.bf16 %v2000, %v1999
        %v2061 = vpack.c.bf16 %v2002, %v2001
        %v2062 = vpack.c.bf16 %v2004, %v2003
        %v2063 = vpack.c.bf16 %v2006, %v2005
        %v2064 = vpack.c.bf16 %v2008, %v2007
        %v2065 = vpack.c.bf16 %v2010, %v2009
        %v2066 = vpack.c.bf16 %v2012, %v2011
        %v2067 = vpack.c.bf16 %v2014, %v2013
        %v2068 = vpack.c.bf16 %v2016, %v2015
        %v2069 = vpack.c.bf16 %v2018, %v2017
        %v2070 = vpack.c.bf16 %v2020, %v2019
        %v2071 = vpack.c.bf16 %v2022, %v2021
        %v2072 = vpack.c.bf16 %v2024, %v2023
        %v2073 = vpack.c.bf16 %v2026, %v2025
        %v2074 = vld [vmem:[%s0] sm:$0xff]
        %v2075 = vld [vmem:[%s0 + $0x8] sm:$0xff]
        %v2078 = vunpack.c.l.b16 %v2074
        %v2079 = vunpack.c.h.b16 %v2074
        %v2080 = vunpack.c.l.b16 %v2075
        %v2081 = vunpack.c.h.b16 %v2075
        %v2082 = vpack.c.b16 %v2080, %v2078
        %v2083 = vpack.c.b16 %v2081, %v2079
        %vm2086 = vcmask 130048
        %v2088 = vsel %vm2086, %v2027, 0
        %v2091 = vsel %vm2086, %v2028, 0
        %v2094 = vsel %vm2086, %v2029, 0
        %v2097 = vsel %vm2086, %v2030, 0
        %v2100 = vsel %vm2086, %v2031, 0
        %v2103 = vsel %vm2086, %v2032, 0
        %v2106 = vsel %vm2086, %v2033, 0
        %v2109 = vsel %vm2086, %v2034, 0
        %v2112 = vsel %vm2086, %v2035, 0
        %v2115 = vsel %vm2086, %v2036, 0
        %v2118 = vsel %vm2086, %v2037, 0
        %v2121 = vsel %vm2086, %v2038, 0
        %v2124 = vsel %vm2086, %v2039, 0
        %v2127 = vsel %vm2086, %v2040, 0
        %v2130 = vsel %vm2086, %v2041, 0
        %v2133 = vsel %vm2086, %v2042, 0
        %v2136 = vsel %vm2086, %v2043, 0
        %v2139 = vsel %vm2086, %v2044, 0
        %v2142 = vsel %vm2086, %v2045, 0
        %v2145 = vsel %vm2086, %v2046, 0
        %v2148 = vsel %vm2086, %v2047, 0
        %v2151 = vsel %vm2086, %v2048, 0
        %v2154 = vsel %vm2086, %v2049, 0
        %v2157 = vsel %vm2086, %v2050, 0
        %v2160 = vsel %vm2086, %v2051, 0
        %v2163 = vsel %vm2086, %v2052, 0
        %v2166 = vsel %vm2086, %v2053, 0
        %v2169 = vsel %vm2086, %v2054, 0
        %v2172 = vsel %vm2086, %v2055, 0
        %v2175 = vsel %vm2086, %v2056, 0
        %v2178 = vsel %vm2086, %v2057, 0
        %v2181 = vsel %vm2086, %v2058, 0
        %v2184 = vsel %vm2086, %v2059, 0
        %v2187 = vsel %vm2086, %v2060, 0
        %v2190 = vsel %vm2086, %v2061, 0
        %v2193 = vsel %vm2086, %v2062, 0
        %v2196 = vsel %vm2086, %v2063, 0
        %v2199 = vsel %vm2086, %v2064, 0
        %v2202 = vsel %vm2086, %v2065, 0
        %v2205 = vsel %vm2086, %v2066, 0
        %v2208 = vsel %vm2086, %v2067, 0
        %v2211 = vsel %vm2086, %v2068, 0
        %v2214 = vsel %vm2086, %v2069, 0
        %v2217 = vsel %vm2086, %v2070, 0
        %v2220 = vsel %vm2086, %v2071, 0
        %v2223 = vsel %vm2086, %v2072, 0
        %v2226 = vsel %vm2086, %v2073, 0
        %2228 = vmatprep.subr.bf16.mxu0 %v2083
        %2229 = vmatpush1.bf16.msra.mxu0 %v2082
        %2230 = vmatprep.subr.bf16.mxu0 0
        %2231 = vmatpush1.bf16.msra.mxu0 0
        %2232 = vmatprep.subr.bf16.mxu0 0
        %2233 = vmatpush1.bf16.msra.mxu0 0
        %2234 = vmatprep.subr.bf16.mxu0 0
        %2235 = vmatpush1.bf16.msra.mxu0 0
        %2236 = vmatprep.subr.bf16.mxu0 0
        %2237 = vmatpush1.bf16.msra.mxu0 0
        %2238 = vmatprep.subr.bf16.mxu0 0
        %2239 = vmatpush1.bf16.msra.mxu0 0
        %2240 = vmatprep.subr.bf16.mxu0 0
        %2241 = vmatpush1.bf16.msra.mxu0 0
        %2242 = vmatprep.subr.bf16.mxu0 0
        %2243 = vmatpush1.bf16.msra.mxu0 0
        %2244 = vmatprep.subr.bf16.mxu0 0
        %2245 = vmatpush1.bf16.msra.mxu0 0
        %2246 = vmatprep.subr.bf16.mxu0 0
        %2247 = vmatpush1.bf16.msra.mxu0 0
        %2248 = vmatprep.subr.bf16.mxu0 0
        %2249 = vmatpush1.bf16.msra.mxu0 0
        %2250 = vmatprep.subr.bf16.mxu0 0
        %2251 = vmatpush1.bf16.msra.mxu0 0
        %2252 = vmatprep.subr.bf16.mxu0 0
        %2253 = vmatpush1.bf16.msra.mxu0 0
        %2254 = vmatprep.subr.bf16.mxu0 0
        %2255 = vmatpush1.bf16.msra.mxu0 0
        %2256 = vmatprep.subr.bf16.mxu0 0
        %2257 = vmatpush1.bf16.msra.mxu0 0
        %2258 = vmatprep.subr.bf16.mxu0 0
        %2259 = vmatpush1.bf16.msra.mxu0 0
        %2260 = vmatprep.mubr.bf16.mxu0 0
        %2261 = vmatmul.mubr.bf16.gmra.mrb[0].mxu0 %v2088
        %v2262 = vpop.f32.mrb[0].mxu0
        %v2263 = vadd.f32 0.0, %v2262
        %v2264 = vpop.f32.mrb[0].mxu0
        %v2265 = vadd.f32 0.0, %v2264
        %v2266 = vpop.f32.mrb[0].mxu0
        %v2267 = vadd.f32 0.0, %v2266
        %v2268 = vpop.f32.mrb[0].mxu0
        %v2269 = vadd.f32 0.0, %v2268
        %2270 = vmatprep.mubr.bf16.mxu0 0
        %2271 = vmatmul.mubr.bf16.gmra.mrb[0].mxu0 %v2091
        %v2272 = vpop.f32.mrb[0].mxu0
        %v2273 = vadd.f32 0.0, %v2272
        %v2274 = vpop.f32.mrb[0].mxu0
        %v2275 = vadd.f32 0.0, %v2274
        %v2276 = vpop.f32.mrb[0].mxu0
        %v2277 = vadd.f32 0.0, %v2276
        %v2278 = vpop.f32.mrb[0].mxu0
        %v2279 = vadd.f32 0.0, %v2278
        %2280 = vmatprep.mubr.bf16.mxu0 0
        %2281 = vmatmul.mubr.bf16.gmra.mrb[0].mxu0 %v2094
        %v2282 = vpop.f32.mrb[0].mxu0
        %v2283 = vadd.f32 0.0, %v2282
        %v2284 = vpop.f32.mrb[0].mxu0
        %v2285 = vadd.f32 0.0, %v2284
        %v2286 = vpop.f32.mrb[0].mxu0
        %v2287 = vadd.f32 0.0, %v2286
        %v2288 = vpop.f32.mrb[0].mxu0
        %v2289 = vadd.f32 0.0, %v2288
        %2290 = vmatprep.mubr.bf16.mxu0 0
        %2291 = vmatmul.mubr.bf16.gmra.mrb[0].mxu0 %v2097
        %v2292 = vpop.f32.mrb[0].mxu0
        %v2293 = vadd.f32 0.0, %v2292
        %v2294 = vpop.f32.mrb[0].mxu0
        %v2295 = vadd.f32 0.0, %v2294
        %v2296 = vpop.f32.mrb[0].mxu0
        %v2297 = vadd.f32 0.0, %v2296
        %v2298 = vpop.f32.mrb[0].mxu0
        %v2299 = vadd.f32 0.0, %v2298
        %2300 = vmatprep.mubr.bf16.mxu0 0
        %2301 = vmatmul.mubr.bf16.gmra.mrb[0].mxu0 %v2100
        %v2302 = vpop.f32.mrb[0].mxu0
        %v2303 = vadd.f32 0.0, %v2302
        %v2304 = vpop.f32.mrb[0].mxu0
        %v2305 = vadd.f32 0.0, %v2304
        %v2306 = vpop.f32.mrb[0].mxu0
        %v2307 = vadd.f32 0.0, %v2306
        %v2308 = vpop.f32.mrb[0].mxu0
        %v2309 = vadd.f32 0.0, %v2308
        %2310 = vmatprep.mubr.bf16.mxu0 0
        %2311 = vmatmul.mubr.bf16.gmra.mrb[0].mxu0 %v2103
        %v2312 = vpop.f32.mrb[0].mxu0
        %v2313 = vadd.f32 0.0, %v2312
        %v2314 = vpop.f32.mrb[0].mxu0
        %v2315 = vadd.f32 0.0, %v2314
        %v2316 = vpop.f32.mrb[0].mxu0
        %v2317 = vadd.f32 0.0, %v2316
        %v2318 = vpop.f32.mrb[0].mxu0
        %v2319 = vadd.f32 0.0, %v2318
        %2320 = vmatprep.mubr.bf16.mxu0 0
        %2321 = vmatmul.mubr.bf16.gmra.mrb[0].mxu0 %v2106
        %v2322 = vpop.f32.mrb[0].mxu0
        %v2323 = vadd.f32 0.0, %v2322
        %v2324 = vpop.f32.mrb[0].mxu0
        %v2325 = vadd.f32 0.0, %v2324
        %v2326 = vpop.f32.mrb[0].mxu0
        %v2327 = vadd.f32 0.0, %v2326
        %v2328 = vpop.f32.mrb[0].mxu0
        %v2329 = vadd.f32 0.0, %v2328
        %2330 = vmatprep.mubr.bf16.mxu0 0
        %2331 = vmatmul.mubr.bf16.gmra.mrb[0].mxu0 %v2109
        %v2332 = vpop.f32.mrb[0].mxu0
        %v2333 = vadd.f32 0.0, %v2332
        %v2334 = vpop.f32.mrb[0].mxu0
        %v2335 = vadd.f32 0.0, %v2334
        %v2336 = vpop.f32.mrb[0].mxu0
        %v2337 = vadd.f32 0.0, %v2336
        %v2338 = vpop.f32.mrb[0].mxu0
        %v2339 = vadd.f32 0.0, %v2338
        %2340 = vmatprep.mubr.bf16.mxu0 0
        %2341 = vmatmul.mubr.bf16.gmra.mrb[0].mxu0 %v2112
        %v2342 = vpop.f32.mrb[0].mxu0
        %v2343 = vadd.f32 0.0, %v2342
        %v2344 = vpop.f32.mrb[0].mxu0
        %v2345 = vadd.f32 0.0, %v2344
        %v2346 = vpop.f32.mrb[0].mxu0
        %v2347 = vadd.f32 0.0, %v2346
        %v2348 = vpop.f32.mrb[0].mxu0
        %v2349 = vadd.f32 0.0, %v2348
        %2350 = vmatprep.mubr.bf16.mxu0 0
        %2351 = vmatmul.mubr.bf16.gmra.mrb[0].mxu0 %v2115
        %v2352 = vpop.f32.mrb[0].mxu0
        %v2353 = vadd.f32 0.0, %v2352
        %v2354 = vpop.f32.mrb[0].mxu0
        %v2355 = vadd.f32 0.0, %v2354
        %v2356 = vpop.f32.mrb[0].mxu0
        %v2357 = vadd.f32 0.0, %v2356
        %v2358 = vpop.f32.mrb[0].mxu0
        %v2359 = vadd.f32 0.0, %v2358
        %2360 = vmatprep.mubr.bf16.mxu0 0
        %2361 = vmatmul.mubr.bf16.gmra.mrb[0].mxu0 %v2118
        %v2362 = vpop.f32.mrb[0].mxu0
        %v2363 = vadd.f32 0.0, %v2362
        %v2364 = vpop.f32.mrb[0].mxu0
        %v2365 = vadd.f32 0.0, %v2364
        %v2366 = vpop.f32.mrb[0].mxu0
        %v2367 = vadd.f32 0.0, %v2366
        %v2368 = vpop.f32.mrb[0].mxu0
        %v2369 = vadd.f32 0.0, %v2368
        %2370 = vmatprep.mubr.bf16.mxu0 0
        %2371 = vmatmul.mubr.bf16.gmra.mrb[0].mxu0 %v2121
        %v2372 = vpop.f32.mrb[0].mxu0
        %v2373 = vadd.f32 0.0, %v2372
        %v2374 = vpop.f32.mrb[0].mxu0
        %v2375 = vadd.f32 0.0, %v2374
        %v2376 = vpop.f32.mrb[0].mxu0
        %v2377 = vadd.f32 0.0, %v2376
        %v2378 = vpop.f32.mrb[0].mxu0
        %v2379 = vadd.f32 0.0, %v2378
        %2380 = vmatprep.mubr.bf16.mxu0 0
        %2381 = vmatmul.mubr.bf16.gmra.mrb[0].mxu0 %v2124
        %v2382 = vpop.f32.mrb[0].mxu0
        %v2383 = vadd.f32 0.0, %v2382
        %v2384 = vpop.f32.mrb[0].mxu0
        %v2385 = vadd.f32 0.0, %v2384
        %v2386 = vpop.f32.mrb[0].mxu0
        %v2387 = vadd.f32 0.0, %v2386
        %v2388 = vpop.f32.mrb[0].mxu0
        %v2389 = vadd.f32 0.0, %v2388
        %2390 = vmatprep.mubr.bf16.mxu0 0
        %2391 = vmatmul.mubr.bf16.gmra.mrb[0].mxu0 %v2127
        %v2392 = vpop.f32.mrb[0].mxu0
        %v2393 = vadd.f32 0.0, %v2392
        %v2394 = vpop.f32.mrb[0].mxu0
        %v2395 = vadd.f32 0.0, %v2394
        %v2396 = vpop.f32.mrb[0].mxu0
        %v2397 = vadd.f32 0.0, %v2396
        %v2398 = vpop.f32.mrb[0].mxu0
        %v2399 = vadd.f32 0.0, %v2398
        %2400 = vmatprep.mubr.bf16.mxu0 0
        %2401 = vmatmul.mubr.bf16.gmra.mrb[0].mxu0 %v2130
        %v2402 = vpop.f32.mrb[0].mxu0
        %v2403 = vadd.f32 0.0, %v2402
        %v2404 = vpop.f32.mrb[0].mxu0
        %v2405 = vadd.f32 0.0, %v2404
        %v2406 = vpop.f32.mrb[0].mxu0
        %v2407 = vadd.f32 0.0, %v2406
        %v2408 = vpop.f32.mrb[0].mxu0
        %v2409 = vadd.f32 0.0, %v2408
        %2410 = vmatprep.mubr.bf16.mxu0 0
        %2411 = vmatmul.mubr.bf16.gmra.mrb[0].mxu0 %v2133
        %v2412 = vpop.f32.mrb[0].mxu0
        %v2413 = vadd.f32 0.0, %v2412
        %v2414 = vpop.f32.mrb[0].mxu0
        %v2415 = vadd.f32 0.0, %v2414
        %v2416 = vpop.f32.mrb[0].mxu0
        %v2417 = vadd.f32 0.0, %v2416
        %v2418 = vpop.f32.mrb[0].mxu0
        %v2419 = vadd.f32 0.0, %v2418
        %2420 = vmatprep.mubr.bf16.mxu0 0
        %2421 = vmatmul.mubr.bf16.gmra.mrb[0].mxu0 %v2136
        %v2422 = vpop.f32.mrb[0].mxu0
        %v2423 = vadd.f32 0.0, %v2422
        %v2424 = vpop.f32.mrb[0].mxu0
        %v2425 = vadd.f32 0.0, %v2424
        %v2426 = vpop.f32.mrb[0].mxu0
        %v2427 = vadd.f32 0.0, %v2426
        %v2428 = vpop.f32.mrb[0].mxu0
        %v2429 = vadd.f32 0.0, %v2428
        %2430 = vmatprep.mubr.bf16.mxu0 0
        %2431 = vmatmul.mubr.bf16.gmra.mrb[0].mxu0 %v2139
        %v2432 = vpop.f32.mrb[0].mxu0
        %v2433 = vadd.f32 0.0, %v2432
        %v2434 = vpop.f32.mrb[0].mxu0
        %v2435 = vadd.f32 0.0, %v2434
        %v2436 = vpop.f32.mrb[0].mxu0
        %v2437 = vadd.f32 0.0, %v2436
        %v2438 = vpop.f32.mrb[0].mxu0
        %v2439 = vadd.f32 0.0, %v2438
        %2440 = vmatprep.mubr.bf16.mxu0 0
        %2441 = vmatmul.mubr.bf16.gmra.mrb[0].mxu0 %v2142
        %v2442 = vpop.f32.mrb[0].mxu0
        %v2443 = vadd.f32 0.0, %v2442
        %v2444 = vpop.f32.mrb[0].mxu0
        %v2445 = vadd.f32 0.0, %v2444
        %v2446 = vpop.f32.mrb[0].mxu0
        %v2447 = vadd.f32 0.0, %v2446
        %v2448 = vpop.f32.mrb[0].mxu0
        %v2449 = vadd.f32 0.0, %v2448
        %2450 = vmatprep.mubr.bf16.mxu0 0
        %2451 = vmatmul.mubr.bf16.gmra.mrb[0].mxu0 %v2145
        %v2452 = vpop.f32.mrb[0].mxu0
        %v2453 = vadd.f32 0.0, %v2452
        %v2454 = vpop.f32.mrb[0].mxu0
        %v2455 = vadd.f32 0.0, %v2454
        %v2456 = vpop.f32.mrb[0].mxu0
        %v2457 = vadd.f32 0.0, %v2456
        %v2458 = vpop.f32.mrb[0].mxu0
        %v2459 = vadd.f32 0.0, %v2458
        %2460 = vmatprep.mubr.bf16.mxu0 0
        %2461 = vmatmul.mubr.bf16.gmra.mrb[0].mxu0 %v2148
        %v2462 = vpop.f32.mrb[0].mxu0
        %v2463 = vadd.f32 0.0, %v2462
        %v2464 = vpop.f32.mrb[0].mxu0
        %v2465 = vadd.f32 0.0, %v2464
        %v2466 = vpop.f32.mrb[0].mxu0
        %v2467 = vadd.f32 0.0, %v2466
        %v2468 = vpop.f32.mrb[0].mxu0
        %v2469 = vadd.f32 0.0, %v2468
        %2470 = vmatprep.mubr.bf16.mxu0 0
        %2471 = vmatmul.mubr.bf16.gmra.mrb[0].mxu0 %v2151
        %v2472 = vpop.f32.mrb[0].mxu0
        %v2473 = vadd.f32 0.0, %v2472
        %v2474 = vpop.f32.mrb[0].mxu0
        %v2475 = vadd.f32 0.0, %v2474
        %v2476 = vpop.f32.mrb[0].mxu0
        %v2477 = vadd.f32 0.0, %v2476
        %v2478 = vpop.f32.mrb[0].mxu0
        %v2479 = vadd.f32 0.0, %v2478
        %2480 = vmatprep.mubr.bf16.mxu0 0
        %2481 = vmatmul.mubr.bf16.gmra.mrb[0].mxu0 %v2154
        %v2482 = vpop.f32.mrb[0].mxu0
        %v2483 = vadd.f32 0.0, %v2482
        %v2484 = vpop.f32.mrb[0].mxu0
        %v2485 = vadd.f32 0.0, %v2484
        %v2486 = vpop.f32.mrb[0].mxu0
        %v2487 = vadd.f32 0.0, %v2486
        %v2488 = vpop.f32.mrb[0].mxu0
        %v2489 = vadd.f32 0.0, %v2488
        %2490 = vmatprep.mubr.bf16.mxu0 0
        %2491 = vmatmul.mubr.bf16.gmra.mrb[0].mxu0 %v2157
        %v2492 = vpop.f32.mrb[0].mxu0
        %v2493 = vadd.f32 0.0, %v2492
        %v2494 = vpop.f32.mrb[0].mxu0
        %v2495 = vadd.f32 0.0, %v2494
        %v2496 = vpop.f32.mrb[0].mxu0
        %v2497 = vadd.f32 0.0, %v2496
        %v2498 = vpop.f32.mrb[0].mxu0
        %v2499 = vadd.f32 0.0, %v2498
        %2500 = vmatprep.mubr.bf16.mxu0 0
        %2501 = vmatmul.mubr.bf16.gmra.mrb[0].mxu0 %v2160
        %v2502 = vpop.f32.mrb[0].mxu0
        %v2503 = vadd.f32 0.0, %v2502
        %v2504 = vpop.f32.mrb[0].mxu0
        %v2505 = vadd.f32 0.0, %v2504
        %v2506 = vpop.f32.mrb[0].mxu0
        %v2507 = vadd.f32 0.0, %v2506
        %v2508 = vpop.f32.mrb[0].mxu0
        %v2509 = vadd.f32 0.0, %v2508
        %2510 = vmatprep.mubr.bf16.mxu0 0
        %2511 = vmatmul.mubr.bf16.gmra.mrb[0].mxu0 %v2163
        %v2512 = vpop.f32.mrb[0].mxu0
        %v2513 = vadd.f32 0.0, %v2512
        %v2514 = vpop.f32.mrb[0].mxu0
        %v2515 = vadd.f32 0.0, %v2514
        %v2516 = vpop.f32.mrb[0].mxu0
        %v2517 = vadd.f32 0.0, %v2516
        %v2518 = vpop.f32.mrb[0].mxu0
        %v2519 = vadd.f32 0.0, %v2518
        %2520 = vmatprep.mubr.bf16.mxu0 0
        %2521 = vmatmul.mubr.bf16.gmra.mrb[0].mxu0 %v2166
        %v2522 = vpop.f32.mrb[0].mxu0
        %v2523 = vadd.f32 0.0, %v2522
        %v2524 = vpop.f32.mrb[0].mxu0
        %v2525 = vadd.f32 0.0, %v2524
        %v2526 = vpop.f32.mrb[0].mxu0
        %v2527 = vadd.f32 0.0, %v2526
        %v2528 = vpop.f32.mrb[0].mxu0
        %v2529 = vadd.f32 0.0, %v2528
        %2530 = vmatprep.mubr.bf16.mxu0 0
        %2531 = vmatmul.mubr.bf16.gmra.mrb[0].mxu0 %v2169
        %v2532 = vpop.f32.mrb[0].mxu0
        %v2533 = vadd.f32 0.0, %v2532
        %v2534 = vpop.f32.mrb[0].mxu0
        %v2535 = vadd.f32 0.0, %v2534
        %v2536 = vpop.f32.mrb[0].mxu0
        %v2537 = vadd.f32 0.0, %v2536
        %v2538 = vpop.f32.mrb[0].mxu0
        %v2539 = vadd.f32 0.0, %v2538
        %2540 = vmatprep.mubr.bf16.mxu0 0
        %2541 = vmatmul.mubr.bf16.gmra.mrb[0].mxu0 %v2172
        %v2542 = vpop.f32.mrb[0].mxu0
        %v2543 = vadd.f32 0.0, %v2542
        %v2544 = vpop.f32.mrb[0].mxu0
        %v2545 = vadd.f32 0.0, %v2544
        %v2546 = vpop.f32.mrb[0].mxu0
        %v2547 = vadd.f32 0.0, %v2546
        %v2548 = vpop.f32.mrb[0].mxu0
        %v2549 = vadd.f32 0.0, %v2548
        %2550 = vmatprep.mubr.bf16.mxu0 0
        %2551 = vmatmul.mubr.bf16.gmra.mrb[0].mxu0 %v2175
        %v2552 = vpop.f32.mrb[0].mxu0
        %v2553 = vadd.f32 0.0, %v2552
        %v2554 = vpop.f32.mrb[0].mxu0
        %v2555 = vadd.f32 0.0, %v2554
        %v2556 = vpop.f32.mrb[0].mxu0
        %v2557 = vadd.f32 0.0, %v2556
        %v2558 = vpop.f32.mrb[0].mxu0
        %v2559 = vadd.f32 0.0, %v2558
        %2560 = vmatprep.mubr.bf16.mxu0 0
        %2561 = vmatmul.mubr.bf16.gmra.mrb[0].mxu0 %v2178
        %v2562 = vpop.f32.mrb[0].mxu0
        %v2563 = vadd.f32 0.0, %v2562
        %v2564 = vpop.f32.mrb[0].mxu0
        %v2565 = vadd.f32 0.0, %v2564
        %v2566 = vpop.f32.mrb[0].mxu0
        %v2567 = vadd.f32 0.0, %v2566
        %v2568 = vpop.f32.mrb[0].mxu0
        %v2569 = vadd.f32 0.0, %v2568
        %2570 = vmatprep.mubr.bf16.mxu0 0
        %2571 = vmatmul.mubr.bf16.gmra.mrb[0].mxu0 %v2181
        %v2572 = vpop.f32.mrb[0].mxu0
        %v2573 = vadd.f32 0.0, %v2572
        %v2574 = vpop.f32.mrb[0].mxu0
        %v2575 = vadd.f32 0.0, %v2574
        %v2576 = vpop.f32.mrb[0].mxu0
        %v2577 = vadd.f32 0.0, %v2576
        %v2578 = vpop.f32.mrb[0].mxu0
        %v2579 = vadd.f32 0.0, %v2578
        %2580 = vmatprep.mubr.bf16.mxu0 0
        %2581 = vmatmul.mubr.bf16.gmra.mrb[0].mxu0 %v2184
        %v2582 = vpop.f32.mrb[0].mxu0
        %v2583 = vadd.f32 0.0, %v2582
        %v2584 = vpop.f32.mrb[0].mxu0
        %v2585 = vadd.f32 0.0, %v2584
        %v2586 = vpop.f32.mrb[0].mxu0
        %v2587 = vadd.f32 0.0, %v2586
        %v2588 = vpop.f32.mrb[0].mxu0
        %v2589 = vadd.f32 0.0, %v2588
        %2590 = vmatprep.mubr.bf16.mxu0 0
        %2591 = vmatmul.mubr.bf16.gmra.mrb[0].mxu0 %v2187
        %v2592 = vpop.f32.mrb[0].mxu0
        %v2593 = vadd.f32 0.0, %v2592
        %v2594 = vpop.f32.mrb[0].mxu0
        %v2595 = vadd.f32 0.0, %v2594
        %v2596 = vpop.f32.mrb[0].mxu0
        %v2597 = vadd.f32 0.0, %v2596
        %v2598 = vpop.f32.mrb[0].mxu0
        %v2599 = vadd.f32 0.0, %v2598
        %2600 = vmatprep.mubr.bf16.mxu0 0
        %2601 = vmatmul.mubr.bf16.gmra.mrb[0].mxu0 %v2190
        %v2602 = vpop.f32.mrb[0].mxu0
        %v2603 = vadd.f32 0.0, %v2602
        %v2604 = vpop.f32.mrb[0].mxu0
        %v2605 = vadd.f32 0.0, %v2604
        %v2606 = vpop.f32.mrb[0].mxu0
        %v2607 = vadd.f32 0.0, %v2606
        %v2608 = vpop.f32.mrb[0].mxu0
        %v2609 = vadd.f32 0.0, %v2608
        %2610 = vmatprep.mubr.bf16.mxu0 0
        %2611 = vmatmul.mubr.bf16.gmra.mrb[0].mxu0 %v2193
        %v2612 = vpop.f32.mrb[0].mxu0
        %v2613 = vadd.f32 0.0, %v2612
        %v2614 = vpop.f32.mrb[0].mxu0
        %v2615 = vadd.f32 0.0, %v2614
        %v2616 = vpop.f32.mrb[0].mxu0
        %v2617 = vadd.f32 0.0, %v2616
        %v2618 = vpop.f32.mrb[0].mxu0
        %v2619 = vadd.f32 0.0, %v2618
        %2620 = vmatprep.mubr.bf16.mxu0 0
        %2621 = vmatmul.mubr.bf16.gmra.mrb[0].mxu0 %v2196
        %v2622 = vpop.f32.mrb[0].mxu0
        %v2623 = vadd.f32 0.0, %v2622
        %v2624 = vpop.f32.mrb[0].mxu0
        %v2625 = vadd.f32 0.0, %v2624
        %v2626 = vpop.f32.mrb[0].mxu0
        %v2627 = vadd.f32 0.0, %v2626
        %v2628 = vpop.f32.mrb[0].mxu0
        %v2629 = vadd.f32 0.0, %v2628
        %2630 = vmatprep.mubr.bf16.mxu0 0
        %2631 = vmatmul.mubr.bf16.gmra.mrb[0].mxu0 %v2199
        %v2632 = vpop.f32.mrb[0].mxu0
        %v2633 = vadd.f32 0.0, %v2632
        %v2634 = vpop.f32.mrb[0].mxu0
        %v2635 = vadd.f32 0.0, %v2634
        %v2636 = vpop.f32.mrb[0].mxu0
        %v2637 = vadd.f32 0.0, %v2636
        %v2638 = vpop.f32.mrb[0].mxu0
        %v2639 = vadd.f32 0.0, %v2638
        %2640 = vmatprep.mubr.bf16.mxu0 0
        %2641 = vmatmul.mubr.bf16.gmra.mrb[0].mxu0 %v2202
        %v2642 = vpop.f32.mrb[0].mxu0
        %v2643 = vadd.f32 0.0, %v2642
        %v2644 = vpop.f32.mrb[0].mxu0
        %v2645 = vadd.f32 0.0, %v2644
        %v2646 = vpop.f32.mrb[0].mxu0
        %v2647 = vadd.f32 0.0, %v2646
        %v2648 = vpop.f32.mrb[0].mxu0
        %v2649 = vadd.f32 0.0, %v2648
        %2650 = vmatprep.mubr.bf16.mxu0 0
        %2651 = vmatmul.mubr.bf16.gmra.mrb[0].mxu0 %v2205
        %v2652 = vpop.f32.mrb[0].mxu0
        %v2653 = vadd.f32 0.0, %v2652
        %v2654 = vpop.f32.mrb[0].mxu0
        %v2655 = vadd.f32 0.0, %v2654
        %v2656 = vpop.f32.mrb[0].mxu0
        %v2657 = vadd.f32 0.0, %v2656
        %v2658 = vpop.f32.mrb[0].mxu0
        %v2659 = vadd.f32 0.0, %v2658
        %2660 = vmatprep.mubr.bf16.mxu0 0
        %2661 = vmatmul.mubr.bf16.gmra.mrb[0].mxu0 %v2208
        %v2662 = vpop.f32.mrb[0].mxu0
        %v2663 = vadd.f32 0.0, %v2662
        %v2664 = vpop.f32.mrb[0].mxu0
        %v2665 = vadd.f32 0.0, %v2664
        %v2666 = vpop.f32.mrb[0].mxu0
        %v2667 = vadd.f32 0.0, %v2666
        %v2668 = vpop.f32.mrb[0].mxu0
        %v2669 = vadd.f32 0.0, %v2668
        %2670 = vmatprep.mubr.bf16.mxu0 0
        %2671 = vmatmul.mubr.bf16.gmra.mrb[0].mxu0 %v2211
        %v2672 = vpop.f32.mrb[0].mxu0
        %v2673 = vadd.f32 0.0, %v2672
        %v2674 = vpop.f32.mrb[0].mxu0
        %v2675 = vadd.f32 0.0, %v2674
        %v2676 = vpop.f32.mrb[0].mxu0
        %v2677 = vadd.f32 0.0, %v2676
        %v2678 = vpop.f32.mrb[0].mxu0
        %v2679 = vadd.f32 0.0, %v2678
        %2680 = vmatprep.mubr.bf16.mxu0 0
        %2681 = vmatmul.mubr.bf16.gmra.mrb[0].mxu0 %v2214
        %v2682 = vpop.f32.mrb[0].mxu0
        %v2683 = vadd.f32 0.0, %v2682
        %v2684 = vpop.f32.mrb[0].mxu0
        %v2685 = vadd.f32 0.0, %v2684
        %v2686 = vpop.f32.mrb[0].mxu0
        %v2687 = vadd.f32 0.0, %v2686
        %v2688 = vpop.f32.mrb[0].mxu0
        %v2689 = vadd.f32 0.0, %v2688
        %2690 = vmatprep.mubr.bf16.mxu0 0
        %2691 = vmatmul.mubr.bf16.gmra.mrb[0].mxu0 %v2217
        %v2692 = vpop.f32.mrb[0].mxu0
        %v2693 = vadd.f32 0.0, %v2692
        %v2694 = vpop.f32.mrb[0].mxu0
        %v2695 = vadd.f32 0.0, %v2694
        %v2696 = vpop.f32.mrb[0].mxu0
        %v2697 = vadd.f32 0.0, %v2696
        %v2698 = vpop.f32.mrb[0].mxu0
        %v2699 = vadd.f32 0.0, %v2698
        %2700 = vmatprep.mubr.bf16.mxu0 0
        %2701 = vmatmul.mubr.bf16.gmra.mrb[0].mxu0 %v2220
        %v2702 = vpop.f32.mrb[0].mxu0
        %v2703 = vadd.f32 0.0, %v2702
        %v2704 = vpop.f32.mrb[0].mxu0
        %v2705 = vadd.f32 0.0, %v2704
        %v2706 = vpop.f32.mrb[0].mxu0
        %v2707 = vadd.f32 0.0, %v2706
        %v2708 = vpop.f32.mrb[0].mxu0
        %v2709 = vadd.f32 0.0, %v2708
        %2710 = vmatprep.mubr.bf16.mxu0 0
        %2711 = vmatmul.mubr.bf16.gmra.mrb[0].mxu0 %v2223
        %v2712 = vpop.f32.mrb[0].mxu0
        %v2713 = vadd.f32 0.0, %v2712
        %v2714 = vpop.f32.mrb[0].mxu0
        %v2715 = vadd.f32 0.0, %v2714
        %v2716 = vpop.f32.mrb[0].mxu0
        %v2717 = vadd.f32 0.0, %v2716
        %v2718 = vpop.f32.mrb[0].mxu0
        %v2719 = vadd.f32 0.0, %v2718
        %2720 = vmatprep.mubr.bf16.mxu0 0
        %2721 = vmatmul.mubr.bf16.gmra.mrb[0].mxu0 %v2226
        %v2722 = vpop.f32.mrb[0].mxu0
        %v2723 = vadd.f32 0.0, %v2722
        %v2724 = vpop.f32.mrb[0].mxu0
        %v2725 = vadd.f32 0.0, %v2724
        %v2726 = vpop.f32.mrb[0].mxu0
        %v2727 = vadd.f32 0.0, %v2726
        %v2728 = vpop.f32.mrb[0].mxu0
        %v2729 = vadd.f32 0.0, %v2728
        %2730 = vdwg.mxu0
        %v2731 = vadd.f32 %v2263, 1.0
        %v2732 = vadd.f32 %v2267, 1.0
        %v2733 = vadd.f32 %v2273, 1.0
        %v2734 = vadd.f32 %v2277, 1.0
        %v2735 = vadd.f32 %v2283, 1.0
        %v2736 = vadd.f32 %v2287, 1.0
        %v2737 = vadd.f32 %v2293, 1.0
        %v2738 = vadd.f32 %v2297, 1.0
        %v2739 = vadd.f32 %v2303, 1.0
        %v2740 = vadd.f32 %v2307, 1.0
        %v2741 = vadd.f32 %v2313, 1.0
        %v2742 = vadd.f32 %v2317, 1.0
        %v2743 = vadd.f32 %v2323, 1.0
        %v2744 = vadd.f32 %v2327, 1.0
        %v2745 = vadd.f32 %v2333, 1.0
        %v2746 = vadd.f32 %v2337, 1.0
        %v2747 = vadd.f32 %v2343, 1.0
        %v2748 = vadd.f32 %v2347, 1.0
        %v2749 = vadd.f32 %v2353, 1.0
        %v2750 = vadd.f32 %v2357, 1.0
        %v2751 = vadd.f32 %v2363, 1.0
        %v2752 = vadd.f32 %v2367, 1.0
        %v2753 = vadd.f32 %v2373, 1.0
        %v2754 = vadd.f32 %v2377, 1.0
        %v2755 = vadd.f32 %v2383, 1.0
        %v2756 = vadd.f32 %v2387, 1.0
        %v2757 = vadd.f32 %v2393, 1.0
        %v2758 = vadd.f32 %v2397, 1.0
        %v2759 = vadd.f32 %v2403, 1.0
        %v2760 = vadd.f32 %v2407, 1.0
        %v2761 = vadd.f32 %v2413, 1.0
        %v2762 = vadd.f32 %v2417, 1.0
        %v2763 = vadd.f32 %v2423, 1.0
        %v2764 = vadd.f32 %v2427, 1.0
        %v2765 = vadd.f32 %v2433, 1.0
        %v2766 = vadd.f32 %v2437, 1.0
        %v2767 = vadd.f32 %v2443, 1.0
        %v2768 = vadd.f32 %v2447, 1.0
        %v2769 = vadd.f32 %v2453, 1.0
        %v2770 = vadd.f32 %v2457, 1.0
        %v2771 = vadd.f32 %v2463, 1.0
        %v2772 = vadd.f32 %v2467, 1.0
        %v2773 = vadd.f32 %v2473, 1.0
        %v2774 = vadd.f32 %v2477, 1.0
        %v2775 = vadd.f32 %v2483, 1.0
        %v2776 = vadd.f32 %v2487, 1.0
        %v2777 = vadd.f32 %v2493, 1.0
        %v2778 = vadd.f32 %v2497, 1.0
        %v2779 = vadd.f32 %v2503, 1.0
        %v2780 = vadd.f32 %v2507, 1.0
        %v2781 = vadd.f32 %v2513, 1.0
        %v2782 = vadd.f32 %v2517, 1.0
        %v2783 = vadd.f32 %v2523, 1.0
        %v2784 = vadd.f32 %v2527, 1.0
        %v2785 = vadd.f32 %v2533, 1.0
        %v2786 = vadd.f32 %v2537, 1.0
        %v2787 = vadd.f32 %v2543, 1.0
        %v2788 = vadd.f32 %v2547, 1.0
        %v2789 = vadd.f32 %v2553, 1.0
        %v2790 = vadd.f32 %v2557, 1.0
        %v2791 = vadd.f32 %v2563, 1.0
        %v2792 = vadd.f32 %v2567, 1.0
        %v2793 = vadd.f32 %v2573, 1.0
        %v2794 = vadd.f32 %v2577, 1.0
        %v2795 = vadd.f32 %v2583, 1.0
        %v2796 = vadd.f32 %v2587, 1.0
        %v2797 = vadd.f32 %v2593, 1.0
        %v2798 = vadd.f32 %v2597, 1.0
        %v2799 = vadd.f32 %v2603, 1.0
        %v2800 = vadd.f32 %v2607, 1.0
        %v2801 = vadd.f32 %v2613, 1.0
        %v2802 = vadd.f32 %v2617, 1.0
        %v2803 = vadd.f32 %v2623, 1.0
        %v2804 = vadd.f32 %v2627, 1.0
        %v2805 = vadd.f32 %v2633, 1.0
        %v2806 = vadd.f32 %v2637, 1.0
        %v2807 = vadd.f32 %v2643, 1.0
        %v2808 = vadd.f32 %v2647, 1.0
        %v2809 = vadd.f32 %v2653, 1.0
        %v2810 = vadd.f32 %v2657, 1.0
        %v2811 = vadd.f32 %v2663, 1.0
        %v2812 = vadd.f32 %v2667, 1.0
        %v2813 = vadd.f32 %v2673, 1.0
        %v2814 = vadd.f32 %v2677, 1.0
        %v2815 = vadd.f32 %v2683, 1.0
        %v2816 = vadd.f32 %v2687, 1.0
        %v2817 = vadd.f32 %v2693, 1.0
        %v2818 = vadd.f32 %v2697, 1.0
        %v2819 = vadd.f32 %v2703, 1.0
        %v2820 = vadd.f32 %v2707, 1.0
        %v2821 = vadd.f32 %v2713, 1.0
        %v2822 = vadd.f32 %v2717, 1.0
        %v2823 = vadd.f32 %v2723, 1.0
        %v2824 = vadd.f32 %v2727, 1.0
        %v2825 = vmul.f32 %v1273, %v2731
        %v2826 = vmul.f32 %v1274, %v2732
        %v2827 = vmul.f32 %v1275, %v2733
        %v2828 = vmul.f32 %v1276, %v2734
        %v2829 = vmul.f32 %v1277, %v2735
        %v2830 = vmul.f32 %v1278, %v2736
        %v2831 = vmul.f32 %v1279, %v2737
        %v2832 = vmul.f32 %v1280, %v2738
        %v2833 = vmul.f32 %v1281, %v2739
        %v2834 = vmul.f32 %v1282, %v2740
        %v2835 = vmul.f32 %v1283, %v2741
        %v2836 = vmul.f32 %v1284, %v2742
        %v2837 = vmul.f32 %v1285, %v2743
        %v2838 = vmul.f32 %v1286, %v2744
        %v2839 = vmul.f32 %v1287, %v2745
        %v2840 = vmul.f32 %v1288, %v2746
        %v2841 = vmul.f32 %v1289, %v2747
        %v2842 = vmul.f32 %v1290, %v2748
        %v2843 = vmul.f32 %v1291, %v2749
        %v2844 = vmul.f32 %v1292, %v2750
        %v2845 = vmul.f32 %v1293, %v2751
        %v2846 = vmul.f32 %v1294, %v2752
        %v2847 = vmul.f32 %v1295, %v2753
        %v2848 = vmul.f32 %v1296, %v2754
        %v2849 = vmul.f32 %v1297, %v2755
        %v2850 = vmul.f32 %v1298, %v2756
        %v2851 = vmul.f32 %v1299, %v2757
        %v2852 = vmul.f32 %v1300, %v2758
        %v2853 = vmul.f32 %v1301, %v2759
        %v2854 = vmul.f32 %v1302, %v2760
        %v2855 = vmul.f32 %v1303, %v2761
        %v2856 = vmul.f32 %v1304, %v2762
        %v2857 = vmul.f32 %v1305, %v2763
        %v2858 = vmul.f32 %v1306, %v2764
        %v2859 = vmul.f32 %v1307, %v2765
        %v2860 = vmul.f32 %v1308, %v2766
        %v2861 = vmul.f32 %v1309, %v2767
        %v2862 = vmul.f32 %v1310, %v2768
        %v2863 = vmul.f32 %v1311, %v2769
        %v2864 = vmul.f32 %v1312, %v2770
        %v2865 = vmul.f32 %v1313, %v2771
        %v2866 = vmul.f32 %v1314, %v2772
        %v2867 = vmul.f32 %v1315, %v2773
        %v2868 = vmul.f32 %v1316, %v2774
        %v2869 = vmul.f32 %v1317, %v2775
        %v2870 = vmul.f32 %v1318, %v2776
        %v2871 = vmul.f32 %v1319, %v2777
        %v2872 = vmul.f32 %v1320, %v2778
        %v2873 = vmul.f32 %v1321, %v2779
        %v2874 = vmul.f32 %v1322, %v2780
        %v2875 = vmul.f32 %v1323, %v2781
        %v2876 = vmul.f32 %v1324, %v2782
        %v2877 = vmul.f32 %v1325, %v2783
        %v2878 = vmul.f32 %v1326, %v2784
        %v2879 = vmul.f32 %v1327, %v2785
        %v2880 = vmul.f32 %v1328, %v2786
        %v2881 = vmul.f32 %v1329, %v2787
        %v2882 = vmul.f32 %v1330, %v2788
        %v2883 = vmul.f32 %v1331, %v2789
        %v2884 = vmul.f32 %v1332, %v2790
        %v2885 = vmul.f32 %v1333, %v2791
        %v2886 = vmul.f32 %v1334, %v2792
        %v2887 = vmul.f32 %v1335, %v2793
        %v2888 = vmul.f32 %v1336, %v2794
        %v2889 = vmul.f32 %v1337, %v2795
        %v2890 = vmul.f32 %v1338, %v2796
        %v2891 = vmul.f32 %v1339, %v2797
        %v2892 = vmul.f32 %v1340, %v2798
        %v2893 = vmul.f32 %v1341, %v2799
        %v2894 = vmul.f32 %v1342, %v2800
        %v2895 = vmul.f32 %v1343, %v2801
        %v2896 = vmul.f32 %v1344, %v2802
        %v2897 = vmul.f32 %v1345, %v2803
        %v2898 = vmul.f32 %v1346, %v2804
        %v2899 = vmul.f32 %v1347, %v2805
        %v2900 = vmul.f32 %v1348, %v2806
        %v2901 = vmul.f32 %v1349, %v2807
        %v2902 = vmul.f32 %v1350, %v2808
        %v2903 = vmul.f32 %v1351, %v2809
        %v2904 = vmul.f32 %v1352, %v2810
        %v2905 = vmul.f32 %v1353, %v2811
        %v2906 = vmul.f32 %v1354, %v2812
        %v2907 = vmul.f32 %v1355, %v2813
        %v2908 = vmul.f32 %v1356, %v2814
        %v2909 = vmul.f32 %v1357, %v2815
        %v2910 = vmul.f32 %v1358, %v2816
        %v2911 = vmul.f32 %v1359, %v2817
        %v2912 = vmul.f32 %v1360, %v2818
        %v2913 = vmul.f32 %v1361, %v2819
        %v2914 = vmul.f32 %v1362, %v2820
        %v2915 = vmul.f32 %v1363, %v2821
        %v2916 = vmul.f32 %v1364, %v2822
        %v2917 = vmul.f32 %v1365, %v2823
        %v2918 = vmul.f32 %v1366, %v2824
        %v2919 = vadd.f32 %v2825, %v2265
        %v2920 = vadd.f32 %v2826, %v2269
        %v2921 = vadd.f32 %v2827, %v2275
        %v2922 = vadd.f32 %v2828, %v2279
        %v2923 = vadd.f32 %v2829, %v2285
        %v2924 = vadd.f32 %v2830, %v2289
        %v2925 = vadd.f32 %v2831, %v2295
        %v2926 = vadd.f32 %v2832, %v2299
        %v2927 = vadd.f32 %v2833, %v2305
        %v2928 = vadd.f32 %v2834, %v2309
        %v2929 = vadd.f32 %v2835, %v2315
        %v2930 = vadd.f32 %v2836, %v2319
        %v2931 = vadd.f32 %v2837, %v2325
        %v2932 = vadd.f32 %v2838, %v2329
        %v2933 = vadd.f32 %v2839, %v2335
        %v2934 = vadd.f32 %v2840, %v2339
        %v2935 = vadd.f32 %v2841, %v2345
        %v2936 = vadd.f32 %v2842, %v2349
        %v2937 = vadd.f32 %v2843, %v2355
        %v2938 = vadd.f32 %v2844, %v2359
        %v2939 = vadd.f32 %v2845, %v2365
        %v2940 = vadd.f32 %v2846, %v2369
        %v2941 = vadd.f32 %v2847, %v2375
        %v2942 = vadd.f32 %v2848, %v2379
        %v2943 = vadd.f32 %v2849, %v2385
        %v2944 = vadd.f32 %v2850, %v2389
        %v2945 = vadd.f32 %v2851, %v2395
        %v2946 = vadd.f32 %v2852, %v2399
        %v2947 = vadd.f32 %v2853, %v2405
        %v2948 = vadd.f32 %v2854, %v2409
        %v2949 = vadd.f32 %v2855, %v2415
        %v2950 = vadd.f32 %v2856, %v2419
        %v2951 = vadd.f32 %v2857, %v2425
        %v2952 = vadd.f32 %v2858, %v2429
        %v2953 = vadd.f32 %v2859, %v2435
        %v2954 = vadd.f32 %v2860, %v2439
        %v2955 = vadd.f32 %v2861, %v2445
        %v2956 = vadd.f32 %v2862, %v2449
        %v2957 = vadd.f32 %v2863, %v2455
        %v2958 = vadd.f32 %v2864, %v2459
        %v2959 = vadd.f32 %v2865, %v2465
        %v2960 = vadd.f32 %v2866, %v2469
        %v2961 = vadd.f32 %v2867, %v2475
        %v2962 = vadd.f32 %v2868, %v2479
        %v2963 = vadd.f32 %v2869, %v2485
        %v2964 = vadd.f32 %v2870, %v2489
        %v2965 = vadd.f32 %v2871, %v2495
        %v2966 = vadd.f32 %v2872, %v2499
        %v2967 = vadd.f32 %v2873, %v2505
        %v2968 = vadd.f32 %v2874, %v2509
        %v2969 = vadd.f32 %v2875, %v2515
        %v2970 = vadd.f32 %v2876, %v2519
        %v2971 = vadd.f32 %v2877, %v2525
        %v2972 = vadd.f32 %v2878, %v2529
        %v2973 = vadd.f32 %v2879, %v2535
        %v2974 = vadd.f32 %v2880, %v2539
        %v2975 = vadd.f32 %v2881, %v2545
        %v2976 = vadd.f32 %v2882, %v2549
        %v2977 = vadd.f32 %v2883, %v2555
        %v2978 = vadd.f32 %v2884, %v2559
        %v2979 = vadd.f32 %v2885, %v2565
        %v2980 = vadd.f32 %v2886, %v2569
        %v2981 = vadd.f32 %v2887, %v2575
        %v2982 = vadd.f32 %v2888, %v2579
        %v2983 = vadd.f32 %v2889, %v2585
        %v2984 = vadd.f32 %v2890, %v2589
        %v2985 = vadd.f32 %v2891, %v2595
        %v2986 = vadd.f32 %v2892, %v2599
        %v2987 = vadd.f32 %v2893, %v2605
        %v2988 = vadd.f32 %v2894, %v2609
        %v2989 = vadd.f32 %v2895, %v2615
        %v2990 = vadd.f32 %v2896, %v2619
        %v2991 = vadd.f32 %v2897, %v2625
        %v2992 = vadd.f32 %v2898, %v2629
        %v2993 = vadd.f32 %v2899, %v2635
        %v2994 = vadd.f32 %v2900, %v2639
        %v2995 = vadd.f32 %v2901, %v2645
        %v2996 = vadd.f32 %v2902, %v2649
        %v2997 = vadd.f32 %v2903, %v2655
        %v2998 = vadd.f32 %v2904, %v2659
        %v2999 = vadd.f32 %v2905, %v2665
        %v3000 = vadd.f32 %v2906, %v2669
        %v3001 = vadd.f32 %v2907, %v2675
        %v3002 = vadd.f32 %v2908, %v2679
        %v3003 = vadd.f32 %v2909, %v2685
        %v3004 = vadd.f32 %v2910, %v2689
        %v3005 = vadd.f32 %v2911, %v2695
        %v3006 = vadd.f32 %v2912, %v2699
        %v3007 = vadd.f32 %v2913, %v2705
        %v3008 = vadd.f32 %v2914, %v2709
        %v3009 = vadd.f32 %v2915, %v2715
        %v3010 = vadd.f32 %v2916, %v2719
        %v3011 = vadd.f32 %v2917, %v2725
        %v3012 = vadd.f32 %v2918, %v2729
        %3013 = vst [vmem:[%s204] sm:$0xff] %v2919
        %3014 = vst [vmem:[%s204 + $0x8] sm:$0xff] %v2920
        %3015 = vst [vmem:[%s204 + $0x10] sm:$0xff] %v2921
        %3016 = vst [vmem:[%s204 + $0x18] sm:$0xff] %v2922
        %3017 = vst [vmem:[%s204 + $0x20] sm:$0xff] %v2923
        %3018 = vst [vmem:[%s204 + $0x28] sm:$0xff] %v2924
        %3019 = vst [vmem:[%s204 + $0x30] sm:$0xff] %v2925
        %3020 = vst [vmem:[%s204 + $0x38] sm:$0xff] %v2926
        %3021 = vst [vmem:[%s204 + $0x40] sm:$0xff] %v2927
        %3022 = vst [vmem:[%s204 + $0x48] sm:$0xff] %v2928
        %3023 = vst [vmem:[%s204 + $0x50] sm:$0xff] %v2929
        %3024 = vst [vmem:[%s204 + $0x58] sm:$0xff] %v2930
        %3025 = vst [vmem:[%s204 + $0x60] sm:$0xff] %v2931
        %3026 = vst [vmem:[%s204 + $0x68] sm:$0xff] %v2932
        %3027 = vst [vmem:[%s204 + $0x70] sm:$0xff] %v2933
        %3028 = vst [vmem:[%s204 + $0x78] sm:$0xff] %v2934
        %3029 = vst [vmem:[%s204 + $0x80] sm:$0xff] %v2935
        %3030 = vst [vmem:[%s204 + $0x88] sm:$0xff] %v2936
        %3031 = vst [vmem:[%s204 + $0x90] sm:$0xff] %v2937
        %3032 = vst [vmem:[%s204 + $0x98] sm:$0xff] %v2938
        %3033 = vst [vmem:[%s204 + $0xa0] sm:$0xff] %v2939
        %3034 = vst [vmem:[%s204 + $0xa8] sm:$0xff] %v2940
        %3035 = vst [vmem:[%s204 + $0xb0] sm:$0xff] %v2941
        %3036 = vst [vmem:[%s204 + $0xb8] sm:$0xff] %v2942
        %3037 = vst [vmem:[%s204 + $0xc0] sm:$0xff] %v2943
        %3038 = vst [vmem:[%s204 + $0xc8] sm:$0xff] %v2944
        %3039 = vst [vmem:[%s204 + $0xd0] sm:$0xff] %v2945
        %3040 = vst [vmem:[%s204 + $0xd8] sm:$0xff] %v2946
        %3041 = vst [vmem:[%s204 + $0xe0] sm:$0xff] %v2947
        %3042 = vst [vmem:[%s204 + $0xe8] sm:$0xff] %v2948
        %3043 = vst [vmem:[%s204 + $0xf0] sm:$0xff] %v2949
        %3044 = vst [vmem:[%s204 + $0xf8] sm:$0xff] %v2950
        %3045 = vst [vmem:[%s204 + $0x100] sm:$0xff] %v2951
        %3046 = vst [vmem:[%s204 + $0x108] sm:$0xff] %v2952
        %3047 = vst [vmem:[%s204 + $0x110] sm:$0xff] %v2953
        %3048 = vst [vmem:[%s204 + $0x118] sm:$0xff] %v2954
        %3049 = vst [vmem:[%s204 + $0x120] sm:$0xff] %v2955
        %3050 = vst [vmem:[%s204 + $0x128] sm:$0xff] %v2956
        %3051 = vst [vmem:[%s204 + $0x130] sm:$0xff] %v2957
        %3052 = vst [vmem:[%s204 + $0x138] sm:$0xff] %v2958
        %3053 = vst [vmem:[%s204 + $0x140] sm:$0xff] %v2959
        %3054 = vst [vmem:[%s204 + $0x148] sm:$0xff] %v2960
        %3055 = vst [vmem:[%s204 + $0x150] sm:$0xff] %v2961
        %3056 = vst [vmem:[%s204 + $0x158] sm:$0xff] %v2962
        %3057 = vst [vmem:[%s204 + $0x160] sm:$0xff] %v2963
        %3058 = vst [vmem:[%s204 + $0x168] sm:$0xff] %v2964
        %3059 = vst [vmem:[%s204 + $0x170] sm:$0xff] %v2965
        %3060 = vst [vmem:[%s204 + $0x178] sm:$0xff] %v2966
        %3061 = vst [vmem:[%s204 + $0x180] sm:$0xff] %v2967
        %3062 = vst [vmem:[%s204 + $0x188] sm:$0xff] %v2968
        %3063 = vst [vmem:[%s204 + $0x190] sm:$0xff] %v2969
        %3064 = vst [vmem:[%s204 + $0x198] sm:$0xff] %v2970
        %3065 = vst [vmem:[%s204 + $0x1a0] sm:$0xff] %v2971
        %3066 = vst [vmem:[%s204 + $0x1a8] sm:$0xff] %v2972
        %3067 = vst [vmem:[%s204 + $0x1b0] sm:$0xff] %v2973
        %3068 = vst [vmem:[%s204 + $0x1b8] sm:$0xff] %v2974
        %3069 = vst [vmem:[%s204 + $0x1c0] sm:$0xff] %v2975
        %3070 = vst [vmem:[%s204 + $0x1c8] sm:$0xff] %v2976
        %3071 = vst [vmem:[%s204 + $0x1d0] sm:$0xff] %v2977
        %3072 = vst [vmem:[%s204 + $0x1d8] sm:$0xff] %v2978
        %3073 = vst [vmem:[%s204 + $0x1e0] sm:$0xff] %v2979
        %3074 = vst [vmem:[%s204 + $0x1e8] sm:$0xff] %v2980
        %3075 = vst [vmem:[%s204 + $0x1f0] sm:$0xff] %v2981
        %3076 = vst [vmem:[%s204 + $0x1f8] sm:$0xff] %v2982
        %3077 = vst [vmem:[%s204 + $0x200] sm:$0xff] %v2983
        %3078 = vst [vmem:[%s204 + $0x208] sm:$0xff] %v2984
        %3079 = vst [vmem:[%s204 + $0x210] sm:$0xff] %v2985
        %3080 = vst [vmem:[%s204 + $0x218] sm:$0xff] %v2986
        %3081 = vst [vmem:[%s204 + $0x220] sm:$0xff] %v2987
        %3082 = vst [vmem:[%s204 + $0x228] sm:$0xff] %v2988
        %3083 = vst [vmem:[%s204 + $0x230] sm:$0xff] %v2989
        %3084 = vst [vmem:[%s204 + $0x238] sm:$0xff] %v2990
        %3085 = vst [vmem:[%s204 + $0x240] sm:$0xff] %v2991
        %3086 = vst [vmem:[%s204 + $0x248] sm:$0xff] %v2992
        %3087 = vst [vmem:[%s204 + $0x250] sm:$0xff] %v2993
        %3088 = vst [vmem:[%s204 + $0x258] sm:$0xff] %v2994
        %3089 = vst [vmem:[%s204 + $0x260] sm:$0xff] %v2995
        %3090 = vst [vmem:[%s204 + $0x268] sm:$0xff] %v2996
        %3091 = vst [vmem:[%s204 + $0x270] sm:$0xff] %v2997
        %3092 = vst [vmem:[%s204 + $0x278] sm:$0xff] %v2998
        %3093 = vst [vmem:[%s204 + $0x280] sm:$0xff] %v2999
        %3094 = vst [vmem:[%s204 + $0x288] sm:$0xff] %v3000
        %3095 = vst [vmem:[%s204 + $0x290] sm:$0xff] %v3001
        %3096 = vst [vmem:[%s204 + $0x298] sm:$0xff] %v3002
        %3097 = vst [vmem:[%s204 + $0x2a0] sm:$0xff] %v3003
        %3098 = vst [vmem:[%s204 + $0x2a8] sm:$0xff] %v3004
        %3099 = vst [vmem:[%s204 + $0x2b0] sm:$0xff] %v3005
        %3100 = vst [vmem:[%s204 + $0x2b8] sm:$0xff] %v3006
        %3101 = vst [vmem:[%s204 + $0x2c0] sm:$0xff] %v3007
        %3102 = vst [vmem:[%s204 + $0x2c8] sm:$0xff] %v3008
        %3103 = vst [vmem:[%s204 + $0x2d0] sm:$0xff] %v3009
        %3104 = vst [vmem:[%s204 + $0x2d8] sm:$0xff] %v3010
        %3105 = vst [vmem:[%s204 + $0x2e0] sm:$0xff] %v3011
        %3106 = vst [vmem:[%s204 + $0x2e8] sm:$0xff] %v3012
        %s3107 = sand.u32 %s98, 1
        %s3108 = scalar_lea.sflag [#allocation3], %s3107
        %s3109 = sand.u32 %s98, 1
        %s3110 = smul.addr %s3109, 752
        %s3111 = scalar_lea.vmem [#allocation2], %s3110
        // Predicated region
        $region33: #{tpu_custom_call.1} parent=31 // pred_check
          %p3112 = pneg %p108
        $region34: #{tpu_custom_call.1} parent=31 // pred_check_branch
          %3114 = sbr.rel (%p3112) target = $region36
        $region35: #{tpu_custom_call.1} parent=31 // pred_region
          %s3115 = smul.u32 94, %s17
          %s3116 = ssub.s32 375, %s3115
          %p3117 = scmp.lt.s32.totalorder %s3116, 94
          %s3118 = scalar_select %p3117, %s3116, 94
          %s3119 = smul.u32 128, %s3118
          %s3121 = ssub.s32 12032, %s3119
          %3122 = vsyncadd %s3108, %s3121
          %p3123 = scmp.ne.s32.totalorder 0, %s3119
          %s3124 = smul.addr %s3115, 128
          %s3125 = scalar_lea.hbm %s3, %s3124
          %s3126 = smul.u32 8, %s3118
          %s3127 = sshll.u32 %s3111, 4
          %s3128 = int_to_ptr.vmem [resolvable:$true] %s3127
          %s3129 = sshll.u32 %s3126, 4
          %3133 = dma.vmem_to_hbm [thread:$0]  (%p3123), %s3128, %s3129, %s3125, %s3108, 128, 128, 8
        $region36: #{tpu_custom_call.1} parent=31 // pred_fallthru
          _
      $region32: #{tpu_custom_call.1} parent=5 // pred_fallthru
        _
      %p3134 = scmp.le.s32.totalorder 2, %s12
      // Predicated region
      $region37: #{tpu_custom_call.1} parent=5 // pred_check
        %p3135 = pneg %p3134
      $region38: #{tpu_custom_call.1} parent=5 // pred_check_branch
        %3137 = sbr.rel (%p3135) target = $region40
      $region39: #{tpu_custom_call.1} parent=5 // pred_region
        %s3138 = ssub.s32 %s12, 2
        // Predicated region
        $region41: #{tpu_custom_call.1} parent=39 // pred_check
          %p3139 = pneg %p114
        $region42: #{tpu_custom_call.1} parent=39 // pred_check_branch
          %3141 = sbr.rel (%p3139) target = $region44
        $region43: #{tpu_custom_call.1} parent=39 // pred_region
          %s3142 = sand.u32 %s99, 1
          %s3143 = scalar_lea.sflag [#allocation3], %s3142
          %s3144 = sand.u32 %s99, 1
          %s3145 = smul.addr %s3144, 752
          %s3146 = scalar_lea.vmem [#allocation2], %s3145
          %3147 = dma.done %s3143, 12032
        $region44: #{tpu_custom_call.1} parent=39 // pred_fallthru
          _
      $region40: #{tpu_custom_call.1} parent=5 // pred_fallthru
        _
    $region6: #{tpu_custom_call.1} parent=1 // loop_footer
      %s16 = sadd.s32 1, %s12
    $region7: #{tpu_custom_call.1} parent=1 // loop_footer_branch
      %11 = sbr.rel target = $region3
    $region8: #{tpu_custom_call.1} parent=1 // loop_exit
      _
    %3148 = vsyncpa [#allocation3], 1
    %s3149 = scalar_lea.sflag [#allocation3], 1
    %3150 = vsyncpa %s3149, 1

</llo_original>
